<compile_context>
chip_gen: v7x
topology: tpu7x:2x2x1
jax: 0.10.0
libtpu: 0.0.40
codegen_flags: <defaults>
</compile_context>

<pallas_src>
import functools

import jax
import jax.numpy as jnp
from jax.experimental import pallas as pl
from jax.experimental.pallas import tpu as pltpu

TOP_K = 5  # config.TOP_K


# ----------------------------- Pallas kernel --------------------------------

def network_action_kernel(x_ref, st_ref,
                          w1_ref, b1_ref, w2_ref, b2_ref,
                          f1p_ref, f1s_ref, fb1_ref,
                          f2_ref, fb2_ref,
                          f3_ref, fb3_ref,
                          f4_ref, fb4_ref,
                          a_ref, *, obs_radius, top_k, block_n):
    k = top_k
    bn = block_n

    xs = x_ref[0]                                    # (8, k*bn): channels on sublanes,
                                                     # lane index = neighbor*bn + agent

    # --- visibility mask via squared distance (no sqrt on the EUP path) ---
    r2 = obs_radius * obs_radius
    mask = (xs[0:1, :] * xs[0:1, :] + xs[1:2, :] * xs[1:2, :] < r2
            ).astype(jnp.float32)                    # (1, k*bn), sublane-broadcast below

    # --- pointwise conv1 -> relu -> conv2 -> relu(*mask), transposed orientation ---
    h1 = jnp.maximum(
        jnp.dot(w1_ref[...], xs, preferred_element_type=jnp.float32)
        + b1_ref[...], 0.0)                          # (64, k*bn)
    h2 = jnp.maximum(
        jnp.dot(w2_ref[...], h1, preferred_element_type=jnp.float32)
        + b2_ref[...], 0.0) * mask                   # (128, k*bn)

    # --- masked max-pool over neighbors: max tree over lane-contiguous slabs ---
    pooled = h2[:, 0:bn]
    for j in range(1, k):                            # static, 128-lane-aligned slices
        pooled = jnp.maximum(pooled, h2[:, j * bn:(j + 1) * bn])   # (128, bn)

    st = st_ref[...]                                 # (8, bn): rows 0..3 = rel_x, rel_y, vx, vy

    # --- MLP head.  fc1 = W_pooled @ pooled (MXU) + 4 VPU FMAs for the state rows ---
    acc = (jnp.dot(f1p_ref[...], pooled, preferred_element_type=jnp.float32)
           + fb1_ref[...])                           # (64, bn)
    for c in range(4):
        acc = acc + f1s_ref[:, c:c + 1] * st[c:c + 1, :]
    h = jnp.maximum(acc, 0.0)
    h = jnp.maximum(
        jnp.dot(f2_ref[...], h, preferred_element_type=jnp.float32)
        + fb2_ref[...], 0.0)                         # (128, bn)
    h = jnp.maximum(
        jnp.dot(f3_ref[...], h, preferred_element_type=jnp.float32)
        + fb3_ref[...], 0.0)                         # (64, bn)
    o = (jnp.dot(f4_ref[...], h, preferred_element_type=jnp.float32)
         + fb4_ref[...])                             # (4, bn)

    # --- gains: a_x = -(k1*rel_x + k2*vx), a_y = -(k3*rel_y + k4*vy) ---
    kk = 2.0 * jax.nn.sigmoid(o) + 0.2               # (4, bn)
    a_x = -(kk[0:1, :] * st[0:1, :] + kk[1:2, :] * st[2:3, :])
    a_y = -(kk[2:3, :] * st[1:2, :] + kk[3:4, :] * st[3:4, :])
    a_ref[...] = jnp.concatenate([a_x, a_y], axis=0)  # (2, bn)


# ------------------------------ JAX glue -------------------------------------

def remove_distant_agents(x, top_k):
    """x: (N, N, C).  Keep the top_k nearest neighbors per agent (torch.topk)."""
    n = x.shape[0]
    if n <= top_k:
        return x
    d_norm = jnp.sqrt(jnp.sum(jnp.square(x[:, :, :2]) + 1e-06, axis=2))
    _, idx = jax.lax.top_k(-d_norm, top_k)                       # (N, top_k)
    return jnp.take_along_axis(x, idx[:, :, None], axis=1)       # (N, top_k, C)


def _pick_block(n, max_bn):
    """Lane-dense row tile: bn multiple of 128, >=2 blocks when N allows (v7x has
    2 TensorCores to shard the "parallel" grid axis across), bn derived from N so
    the zero-padded tail is < 128 rows instead of up to bn-1 rows."""
    lane_tiles = pl.cdiv(n, 128)
    n_blocks = max(pl.cdiv(n, max_bn), 2 if lane_tiles >= 2 else 1)
    bn = pl.cdiv(pl.cdiv(n, n_blocks), 128) * 128
    bn = max(128, min(bn, max_bn))
    n_blocks = pl.cdiv(n, bn)
    return bn, n_blocks


def network_action_forward(params, s, g, obs_radius=1.0, block_n=1024):
    n = s.shape[0]
    # TODO(synk): the O(N^2) pairwise diff + top_k neighbor gather stays in plain
    # JAX (data-dependent gather has no clean BlockSpec form); at large N it
    # dominates and would need its own kernel.
    diff = s[:, None, :] - s[None, :, :]                         # (N, N, 4)
    x = jnp.concatenate([diff, jnp.eye(n, dtype=s.dtype)[:, :, None]], axis=2)
    x = remove_distant_agents(x, TOP_K)                          # (N, K, 5)
    k_eff = x.shape[1]

    state = jnp.concatenate([s[:, :2] - g, s[:, 2:]], axis=1)    # (N, 4)

    bn, n_blocks = _pick_block(n, block_n)
    n_pad = n_blocks * bn

    # Lane-dense, channel-major slab: one contiguous (8, K*bn) tile per grid block.
    # slab[b, c, j*bn + i] = x[b*bn + i, j, c]  (channels padded 5 -> 8 sublanes)
    xt = jnp.transpose(x, (1, 2, 0))                             # (K, 5, N)
    xt = jnp.pad(xt, ((0, 0), (0, 3), (0, n_pad - n)))           # (K, 8, n_pad)
    xt = xt.reshape(k_eff, 8, n_blocks, bn)
    xk = jnp.transpose(xt, (2, 1, 0, 3)).reshape(n_blocks, 8, k_eff * bn)

    # Transposed state tile (rows 0..3 = rel_x, rel_y, vx, vy; rows 4..7 zero).
    st = jnp.pad(state.T, ((0, 4), (0, n_pad - n)))              # (8, n_pad)

    # Weights kept (out, in): they are the MXU LHS in the transposed orientation.
    w1 = jnp.pad(params["conv1_w"][:, :, 0], ((0, 0), (0, 3)))   # (64, 8)
    w2 = params["conv2_w"][:, :, 0]                              # (128, 64)
    f1p = params["fc1_w"][:, :128]                               # (64, 128) pooled part
    f1s = params["fc1_w"][:, 128:]                               # (64, 4)   state part
    col = lambda v: v.reshape(-1, 1)                             # biases as (out, 1)

    inputs = (xk, st,
              w1, col(params["conv1_b"]), w2, col(params["conv2_b"]),
              f1p, f1s, col(params["fc1_b"]),
              params["fc2_w"], col(params["fc2_b"]),
              params["fc3_w"], col(params["fc3_b"]),
              params["fc4_w"], col(params["fc4_b"]))

    def resident(a):  # constant index_map -> weight fetched once, stays in VMEM
        nd = a.ndim
        return pl.BlockSpec(a.shape, lambda i: (0,) * nd)

    in_specs = [
        pl.BlockSpec((1, 8, k_eff * bn), lambda i: (i, 0, 0)),   # x slab (contiguous DMA)
        pl.BlockSpec((8, bn), lambda i: (0, i)),                 # transposed state
    ] + [resident(a) for a in inputs[2:]]

    kernel = functools.partial(network_action_kernel,
                               obs_radius=obs_radius, top_k=k_eff, block_n=bn)
    out = pl.pallas_call(
        kernel,
        out_shape=jax.ShapeDtypeStruct((2, n_pad), jnp.float32),
        grid=(n_blocks,),
        in_specs=in_specs,
        out_specs=pl.BlockSpec((2, bn), lambda i: (0, i)),       # lane-dense output
        compiler_params=pltpu.CompilerParams(
            dimension_semantics=("parallel",),
            vmem_limit_bytes=32 * 1024 * 1024),
    )(*inputs)
    return out[:, :n].T                                          # (N, 2)


# -------------------------- pure-JAX reference --------------------------------

def network_action_reference(params, s, g, obs_radius=1.0):
    n = s.shape[0]
    diff = s[:, None, :] - s[None, :, :]
    x = jnp.concatenate([diff, jnp.eye(n, dtype=s.dtype)[:, :, None]], axis=2)
    x = remove_distant_agents(x, TOP_K)                          # (N, K, 5)
    dist = jnp.linalg.norm(x[:, :, :2], axis=2, keepdims=True)   # (N, K, 1)
    mask = (dist < obs_radius).astype(jnp.float32)
    h = jax.nn.relu(jnp.einsum("nkc,oc->nko", x, params["conv1_w"][:, :, 0])
                    + params["conv1_b"])
    h = jax.nn.relu(jnp.einsum("nkc,oc->nko", h, params["conv2_w"][:, :, 0])
                    + params["conv2_b"])
    pooled = jnp.max(h * mask, axis=1)                           # (N, 128)
    state = jnp.concatenate([s[:, :2] - g, s[:, 2:]], axis=1)    # (N, 4)
    feat = jnp.concatenate([pooled, state], axis=1)              # (N, 132)
    h = jax.nn.relu(feat @ params["fc1_w"].T + params["fc1_b"])
    h = jax.nn.relu(h @ params["fc2_w"].T + params["fc2_b"])
    h = jax.nn.relu(h @ params["fc3_w"].T + params["fc3_b"])
    o = h @ params["fc4_w"].T + params["fc4_b"]
    kk = 2.0 * jax.nn.sigmoid(o) + 0.2
    k1, k2, k3, k4 = kk[:, 0:1], kk[:, 1:2], kk[:, 2:3], kk[:, 3:4]
    zeros = jnp.zeros_like(k1)
    gain_x = -jnp.concatenate([k1, zeros, k2, zeros], axis=1)
    gain_y = -jnp.concatenate([zeros, k3, zeros, k4], axis=1)
    a_x = jnp.sum(state * gain_x, axis=1, keepdims=True)
    a_y = jnp.sum(state * gain_y, axis=1, keepdims=True)
    return jnp.concatenate([a_x, a_y], axis=1)


# ----------------------------- param init -------------------------------------

def init_params(key):
    def uniform(key, shape, fan_in):
        bound = 1.0 / jnp.sqrt(jnp.float32(fan_in))
        return jax.random.uniform(key, shape, jnp.float32, -bound, bound)

    keys = jax.random.split(key, 12)
    return {
        "conv1_w": uniform(keys[0], (64, 5, 1), 5),
        "conv1_b": uniform(keys[1], (64,), 5),
        "conv2_w": uniform(keys[2], (128, 64, 1), 64),
        "conv2_b": uniform(keys[3], (128,), 64),
        "fc1_w": uniform(keys[4], (64, 132), 132),
        "fc1_b": uniform(keys[5], (64,), 132),
        "fc2_w": uniform(keys[6], (128, 64), 64),
        "fc2_b": uniform(keys[7], (128,), 64),
        "fc3_w": uniform(keys[8], (64, 128), 128),
        "fc3_b": uniform(keys[9], (64,), 128),
        "fc4_w": uniform(keys[10], (4, 64), 64),
        "fc4_b": uniform(keys[11], (4,), 64),
    }


# --------------------------------- main ----------------------------------------

if __name__ == "__main__":
    key = jax.random.PRNGKey(0)
    kp, ks, kg = jax.random.split(key, 3)
    N = 8  # agents (> TOP_K so the nearest-neighbor selection path is exercised)
    params = init_params(kp)
    s = jax.random.normal(ks, (N, 4), jnp.float32)   # [px, py, vx, vy] per agent
    g = jax.random.normal(kg, (N, 2), jnp.float32)   # goal positions

    a = network_action_forward(params, s, g, obs_radius=1.0)
    a = jax.block_until_ready(a)

    a_ref = network_action_reference(params, s, g, obs_radius=1.0)
    assert a.shape == (N, 2)
    assert jnp.allclose(a, a_ref, rtol=1e-4, atol=1e-4), (a, a_ref)

    print("KERNEL_OK")
</pallas_src>

<mosaic_0001>
module attributes {stable_mosaic.version = 11 : i64} {
  func.func @network_action_kernel(%arg0: i32, %arg1: memref<1x8x640xf32, #tpu.memory_space<vmem>>, %arg2: memref<8x128xf32, #tpu.memory_space<vmem>>, %arg3: memref<64x8xf32, #tpu.memory_space<vmem>>, %arg4: memref<64x1xf32, #tpu.memory_space<vmem>>, %arg5: memref<128x64xf32, #tpu.memory_space<vmem>>, %arg6: memref<128x1xf32, #tpu.memory_space<vmem>>, %arg7: memref<64x128xf32, #tpu.memory_space<vmem>>, %arg8: memref<64x4xf32, #tpu.memory_space<vmem>>, %arg9: memref<64x1xf32, #tpu.memory_space<vmem>>, %arg10: memref<128x64xf32, #tpu.memory_space<vmem>>, %arg11: memref<128x1xf32, #tpu.memory_space<vmem>>, %arg12: memref<64x128xf32, #tpu.memory_space<vmem>>, %arg13: memref<64x1xf32, #tpu.memory_space<vmem>>, %arg14: memref<4x64xf32, #tpu.memory_space<vmem>>, %arg15: memref<4x1xf32, #tpu.memory_space<vmem>>, %arg16: memref<2x128xf32, #tpu.memory_space<vmem>>) attributes {dimension_semantics = [#tpu.dimension_semantics<parallel>], iteration_bounds = array<i64: 1>, scalar_prefetch = 0 : i64, scratch_operands = 0 : i64, tpu.core_type = #tpu.core_type<tc>, window_params = [{transform_indices = @transform_0, window_bounds = array<i64: 1, 8, 640>}, {transform_indices = @transform_1, window_bounds = array<i64: 8, 128>}, {pipeline_mode = #tpu.pipeline_mode<synchronous>, transform_indices = @transform_2, window_bounds = array<i64: 64, 8>}, {pipeline_mode = #tpu.pipeline_mode<synchronous>, transform_indices = @transform_3, window_bounds = array<i64: 64, 1>}, {pipeline_mode = #tpu.pipeline_mode<synchronous>, transform_indices = @transform_4, window_bounds = array<i64: 128, 64>}, {pipeline_mode = #tpu.pipeline_mode<synchronous>, transform_indices = @transform_5, window_bounds = array<i64: 128, 1>}, {pipeline_mode = #tpu.pipeline_mode<synchronous>, transform_indices = @transform_6, window_bounds = array<i64: 64, 128>}, {pipeline_mode = #tpu.pipeline_mode<synchronous>, transform_indices = @transform_7, window_bounds = array<i64: 64, 4>}, {pipeline_mode = #tpu.pipeline_mode<synchronous>, transform_indices = @transform_8, window_bounds = array<i64: 64, 1>}, {pipeline_mode = #tpu.pipeline_mode<synchronous>, transform_indices = @transform_9, window_bounds = array<i64: 128, 64>}, {pipeline_mode = #tpu.pipeline_mode<synchronous>, transform_indices = @transform_10, window_bounds = array<i64: 128, 1>}, {pipeline_mode = #tpu.pipeline_mode<synchronous>, transform_indices = @transform_11, window_bounds = array<i64: 64, 128>}, {pipeline_mode = #tpu.pipeline_mode<synchronous>, transform_indices = @transform_12, window_bounds = array<i64: 64, 1>}, {pipeline_mode = #tpu.pipeline_mode<synchronous>, transform_indices = @transform_13, window_bounds = array<i64: 4, 64>}, {pipeline_mode = #tpu.pipeline_mode<synchronous>, transform_indices = @transform_14, window_bounds = array<i64: 4, 1>}, {transform_indices = @transform_15, window_bounds = array<i64: 2, 128>}]} {
    %c0 = arith.constant 0 : index
    %c0_0 = arith.constant 0 : index
    %c0_1 = arith.constant 0 : index
    %0 = vector.load %arg1[%c0, %c0_0, %c0_1] : memref<1x8x640xf32, #tpu.memory_space<vmem>>, vector<1x8x640xf32>
    %1 = vector.shape_cast %0 : vector<1x8x640xf32> to vector<8x640xf32>
    %2 = vector.extract_strided_slice %1 {offsets = [0, 0], sizes = [1, 640], strides = [1, 1]} : vector<8x640xf32> to vector<1x640xf32>
    %3 = vector.extract_strided_slice %1 {offsets = [0, 0], sizes = [1, 640], strides = [1, 1]} : vector<8x640xf32> to vector<1x640xf32>
    %4 = arith.mulf %2, %3 : vector<1x640xf32>
    %5 = vector.extract_strided_slice %1 {offsets = [1, 0], sizes = [1, 640], strides = [1, 1]} : vector<8x640xf32> to vector<1x640xf32>
    %6 = vector.extract_strided_slice %1 {offsets = [1, 0], sizes = [1, 640], strides = [1, 1]} : vector<8x640xf32> to vector<1x640xf32>
    %7 = arith.mulf %5, %6 : vector<1x640xf32>
    %8 = arith.addf %4, %7 : vector<1x640xf32>
    %cst = arith.constant 1.000000e+00 : f32
    %9 = vector.broadcast %cst : f32 to vector<1x640xf32>
    %10 = arith.cmpf olt, %8, %9 : vector<1x640xf32>
    %11 = arith.extui %10 : vector<1x640xi1> to vector<1x640xi32>
    %12 = arith.sitofp %11 : vector<1x640xi32> to vector<1x640xf32>
    %c0_2 = arith.constant 0 : index
    %c0_3 = arith.constant 0 : index
    %13 = vector.load %arg3[%c0_2, %c0_3] : memref<64x8xf32, #tpu.memory_space<vmem>>, vector<64x8xf32>
    %cst_4 = arith.constant dense<0.000000e+00> : vector<64x640xf32>
    %14 = tpu.matmul %13, %1, %cst_4 {dimension_numbers = #tpu.dot_dimension_numbers<[1], [0], [0], [1], [0, 0, 1, 1], [], []>} : vector<64x8xf32>, vector<8x640xf32>, vector<64x640xf32> -> vector<64x640xf32>
    %c0_5 = arith.constant 0 : index
    %c0_6 = arith.constant 0 : index
    %15 = vector.load %arg4[%c0_5, %c0_6] : memref<64x1xf32, #tpu.memory_space<vmem>>, vector<64x1xf32>
    %16 = vector.broadcast %15 : vector<64x1xf32> to vector<64x640xf32>
    %17 = arith.addf %14, %16 : vector<64x640xf32>
    %cst_7 = arith.constant 0.000000e+00 : f32
    %18 = vector.broadcast %cst_7 : f32 to vector<64x640xf32>
    %19 = arith.maximumf %17, %18 : vector<64x640xf32>
    %c0_8 = arith.constant 0 : index
    %c0_9 = arith.constant 0 : index
    %20 = vector.load %arg5[%c0_8, %c0_9] : memref<128x64xf32, #tpu.memory_space<vmem>>, vector<128x64xf32>
    %cst_10 = arith.constant dense<0.000000e+00> : vector<128x640xf32>
    %21 = tpu.matmul %20, %19, %cst_10 {dimension_numbers = #tpu.dot_dimension_numbers<[1], [0], [0], [1], [0, 0, 1, 1], [], []>} : vector<128x64xf32>, vector<64x640xf32>, vector<128x640xf32> -> vector<128x640xf32>
    %c0_11 = arith.constant 0 : index
    %c0_12 = arith.constant 0 : index
    %22 = vector.load %arg6[%c0_11, %c0_12] : memref<128x1xf32, #tpu.memory_space<vmem>>, vector<128x1xf32>
    %23 = vector.broadcast %22 : vector<128x1xf32> to vector<128x640xf32>
    %24 = arith.addf %21, %23 : vector<128x640xf32>
    %cst_13 = arith.constant 0.000000e+00 : f32
    %25 = vector.broadcast %cst_13 : f32 to vector<128x640xf32>
    %26 = arith.maximumf %24, %25 : vector<128x640xf32>
    %27 = vector.broadcast %12 : vector<1x640xf32> to vector<128x640xf32>
    %28 = arith.mulf %26, %27 : vector<128x640xf32>
    %29 = vector.extract_strided_slice %28 {offsets = [0, 0], sizes = [128, 128], strides = [1, 1]} : vector<128x640xf32> to vector<128x128xf32>
    %30 = vector.extract_strided_slice %28 {offsets = [0, 128], sizes = [128, 128], strides = [1, 1]} : vector<128x640xf32> to vector<128x128xf32>
    %31 = arith.maximumf %29, %30 : vector<128x128xf32>
    %32 = vector.extract_strided_slice %28 {offsets = [0, 256], sizes = [128, 128], strides = [1, 1]} : vector<128x640xf32> to vector<128x128xf32>
    %33 = arith.maximumf %31, %32 : vector<128x128xf32>
    %34 = vector.extract_strided_slice %28 {offsets = [0, 384], sizes = [128, 128], strides = [1, 1]} : vector<128x640xf32> to vector<128x128xf32>
    %35 = arith.maximumf %33, %34 : vector<128x128xf32>
    %36 = vector.extract_strided_slice %28 {offsets = [0, 512], sizes = [128, 128], strides = [1, 1]} : vector<128x640xf32> to vector<128x128xf32>
    %37 = arith.maximumf %35, %36 : vector<128x128xf32>
    %c0_14 = arith.constant 0 : index
    %c0_15 = arith.constant 0 : index
    %38 = vector.load %arg2[%c0_14, %c0_15] : memref<8x128xf32, #tpu.memory_space<vmem>>, vector<8x128xf32>
    %c0_16 = arith.constant 0 : index
    %c0_17 = arith.constant 0 : index
    %39 = vector.load %arg7[%c0_16, %c0_17] : memref<64x128xf32, #tpu.memory_space<vmem>>, vector<64x128xf32>
    %cst_18 = arith.constant dense<0.000000e+00> : vector<64x128xf32>
    %40 = tpu.matmul %39, %37, %cst_18 {dimension_numbers = #tpu.dot_dimension_numbers<[1], [0], [0], [1], [0, 0, 1, 1], [], []>} : vector<64x128xf32>, vector<128x128xf32>, vector<64x128xf32> -> vector<64x128xf32>
    %c0_19 = arith.constant 0 : index
    %c0_20 = arith.constant 0 : index
    %41 = vector.load %arg9[%c0_19, %c0_20] : memref<64x1xf32, #tpu.memory_space<vmem>>, vector<64x1xf32>
    %42 = vector.broadcast %41 : vector<64x1xf32> to vector<64x128xf32>
    %43 = arith.addf %40, %42 : vector<64x128xf32>
    %c0_21 = arith.constant 0 : index
    %c0_22 = arith.constant 0 : index
    %44 = vector.load %arg8[%c0_21, %c0_22] : memref<64x4xf32, #tpu.memory_space<vmem>>, vector<64x1xf32>
    %45 = vector.extract_strided_slice %38 {offsets = [0, 0], sizes = [1, 128], strides = [1, 1]} : vector<8x128xf32> to vector<1x128xf32>
    %46 = vector.broadcast %44 : vector<64x1xf32> to vector<64x128xf32>
    %47 = vector.broadcast %45 : vector<1x128xf32> to vector<64x128xf32>
    %48 = arith.mulf %46, %47 : vector<64x128xf32>
    %49 = arith.addf %43, %48 : vector<64x128xf32>
    %c0_23 = arith.constant 0 : index
    %c1 = arith.constant 1 : index
    %50 = vector.load %arg8[%c0_23, %c1] : memref<64x4xf32, #tpu.memory_space<vmem>>, vector<64x1xf32>
    %51 = vector.extract_strided_slice %38 {offsets = [1, 0], sizes = [1, 128], strides = [1, 1]} : vector<8x128xf32> to vector<1x128xf32>
    %52 = vector.broadcast %50 : vector<64x1xf32> to vector<64x128xf32>
    %53 = vector.broadcast %51 : vector<1x128xf32> to vector<64x128xf32>
    %54 = arith.mulf %52, %53 : vector<64x128xf32>
    %55 = arith.addf %49, %54 : vector<64x128xf32>
    %c0_24 = arith.constant 0 : index
    %c2 = arith.constant 2 : index
    %56 = vector.load %arg8[%c0_24, %c2] : memref<64x4xf32, #tpu.memory_space<vmem>>, vector<64x1xf32>
    %57 = vector.extract_strided_slice %38 {offsets = [2, 0], sizes = [1, 128], strides = [1, 1]} : vector<8x128xf32> to vector<1x128xf32>
    %58 = vector.broadcast %56 : vector<64x1xf32> to vector<64x128xf32>
    %59 = vector.broadcast %57 : vector<1x128xf32> to vector<64x128xf32>
    %60 = arith.mulf %58, %59 : vector<64x128xf32>
    %61 = arith.addf %55, %60 : vector<64x128xf32>
    %c0_25 = arith.constant 0 : index
    %c3 = arith.constant 3 : index
    %62 = vector.load %arg8[%c0_25, %c3] : memref<64x4xf32, #tpu.memory_space<vmem>>, vector<64x1xf32>
    %63 = vector.extract_strided_slice %38 {offsets = [3, 0], sizes = [1, 128], strides = [1, 1]} : vector<8x128xf32> to vector<1x128xf32>
    %64 = vector.broadcast %62 : vector<64x1xf32> to vector<64x128xf32>
    %65 = vector.broadcast %63 : vector<1x128xf32> to vector<64x128xf32>
    %66 = arith.mulf %64, %65 : vector<64x128xf32>
    %67 = arith.addf %61, %66 : vector<64x128xf32>
    %cst_26 = arith.constant 0.000000e+00 : f32
    %68 = vector.broadcast %cst_26 : f32 to vector<64x128xf32>
    %69 = arith.maximumf %67, %68 : vector<64x128xf32>
    %c0_27 = arith.constant 0 : index
    %c0_28 = arith.constant 0 : index
    %70 = vector.load %arg10[%c0_27, %c0_28] : memref<128x64xf32, #tpu.memory_space<vmem>>, vector<128x64xf32>
    %cst_29 = arith.constant dense<0.000000e+00> : vector<128x128xf32>
    %71 = tpu.matmul %70, %69, %cst_29 {dimension_numbers = #tpu.dot_dimension_numbers<[1], [0], [0], [1], [0, 0, 1, 1], [], []>} : vector<128x64xf32>, vector<64x128xf32>, vector<128x128xf32> -> vector<128x128xf32>
    %c0_30 = arith.constant 0 : index
    %c0_31 = arith.constant 0 : index
    %72 = vector.load %arg11[%c0_30, %c0_31] : memref<128x1xf32, #tpu.memory_space<vmem>>, vector<128x1xf32>
    %73 = vector.broadcast %72 : vector<128x1xf32> to vector<128x128xf32>
    %74 = arith.addf %71, %73 : vector<128x128xf32>
    %cst_32 = arith.constant 0.000000e+00 : f32
    %75 = vector.broadcast %cst_32 : f32 to vector<128x128xf32>
    %76 = arith.maximumf %74, %75 : vector<128x128xf32>
    %c0_33 = arith.constant 0 : index
    %c0_34 = arith.constant 0 : index
    %77 = vector.load %arg12[%c0_33, %c0_34] : memref<64x128xf32, #tpu.memory_space<vmem>>, vector<64x128xf32>
    %cst_35 = arith.constant dense<0.000000e+00> : vector<64x128xf32>
    %78 = tpu.matmul %77, %76, %cst_35 {dimension_numbers = #tpu.dot_dimension_numbers<[1], [0], [0], [1], [0, 0, 1, 1], [], []>} : vector<64x128xf32>, vector<128x128xf32>, vector<64x128xf32> -> vector<64x128xf32>
    %c0_36 = arith.constant 0 : index
    %c0_37 = arith.constant 0 : index
    %79 = vector.load %arg13[%c0_36, %c0_37] : memref<64x1xf32, #tpu.memory_space<vmem>>, vector<64x1xf32>
    %80 = vector.broadcast %79 : vector<64x1xf32> to vector<64x128xf32>
    %81 = arith.addf %78, %80 : vector<64x128xf32>
    %cst_38 = arith.constant 0.000000e+00 : f32
    %82 = vector.broadcast %cst_38 : f32 to vector<64x128xf32>
    %83 = arith.maximumf %81, %82 : vector<64x128xf32>
    %c0_39 = arith.constant 0 : index
    %c0_40 = arith.constant 0 : index
    %84 = vector.load %arg14[%c0_39, %c0_40] : memref<4x64xf32, #tpu.memory_space<vmem>>, vector<4x64xf32>
    %cst_41 = arith.constant dense<0.000000e+00> : vector<4x128xf32>
    %85 = tpu.matmul %84, %83, %cst_41 {dimension_numbers = #tpu.dot_dimension_numbers<[1], [0], [0], [1], [0, 0, 1, 1], [], []>} : vector<4x64xf32>, vector<64x128xf32>, vector<4x128xf32> -> vector<4x128xf32>
    %c0_42 = arith.constant 0 : index
    %c0_43 = arith.constant 0 : index
    %86 = vector.load %arg15[%c0_42, %c0_43] : memref<4x1xf32, #tpu.memory_space<vmem>>, vector<4x1xf32>
    %87 = vector.broadcast %86 : vector<4x1xf32> to vector<4x128xf32>
    %88 = arith.addf %85, %87 : vector<4x128xf32>
    %89 = arith.negf %88 : vector<4x128xf32>
    %90 = math.exp %89 : vector<4x128xf32>
    %cst_44 = arith.constant 1.000000e+00 : f32
    %91 = vector.broadcast %cst_44 : f32 to vector<4x128xf32>
    %92 = arith.addf %91, %90 : vector<4x128xf32>
    %93 = arith.divf %91, %92 : vector<4x128xf32>
    %cst_45 = arith.constant 2.000000e+00 : f32
    %94 = vector.broadcast %cst_45 : f32 to vector<4x128xf32>
    %95 = arith.mulf %94, %93 : vector<4x128xf32>
    %cst_46 = arith.constant 2.000000e-01 : f32
    %96 = vector.broadcast %cst_46 : f32 to vector<4x128xf32>
    %97 = arith.addf %95, %96 : vector<4x128xf32>
    %98 = vector.extract_strided_slice %97 {offsets = [0, 0], sizes = [1, 128], strides = [1, 1]} : vector<4x128xf32> to vector<1x128xf32>
    %99 = vector.extract_strided_slice %38 {offsets = [0, 0], sizes = [1, 128], strides = [1, 1]} : vector<8x128xf32> to vector<1x128xf32>
    %100 = arith.mulf %98, %99 : vector<1x128xf32>
    %101 = vector.extract_strided_slice %97 {offsets = [1, 0], sizes = [1, 128], strides = [1, 1]} : vector<4x128xf32> to vector<1x128xf32>
    %102 = vector.extract_strided_slice %38 {offsets = [2, 0], sizes = [1, 128], strides = [1, 1]} : vector<8x128xf32> to vector<1x128xf32>
    %103 = arith.mulf %101, %102 : vector<1x128xf32>
    %104 = arith.addf %100, %103 : vector<1x128xf32>
    %cst_47 = arith.constant 0.000000e+00 : f32
    %105 = vector.broadcast %cst_47 : f32 to vector<1x128xf32>
    %106 = arith.subf %105, %104 : vector<1x128xf32>
    %107 = vector.extract_strided_slice %97 {offsets = [2, 0], sizes = [1, 128], strides = [1, 1]} : vector<4x128xf32> to vector<1x128xf32>
    %108 = vector.extract_strided_slice %38 {offsets = [1, 0], sizes = [1, 128], strides = [1, 1]} : vector<8x128xf32> to vector<1x128xf32>
    %109 = arith.mulf %107, %108 : vector<1x128xf32>
    %110 = vector.extract_strided_slice %97 {offsets = [3, 0], sizes = [1, 128], strides = [1, 1]} : vector<4x128xf32> to vector<1x128xf32>
    %111 = vector.extract_strided_slice %38 {offsets = [3, 0], sizes = [1, 128], strides = [1, 1]} : vector<8x128xf32> to vector<1x128xf32>
    %112 = arith.mulf %110, %111 : vector<1x128xf32>
    %113 = arith.addf %109, %112 : vector<1x128xf32>
    %cst_48 = arith.constant 0.000000e+00 : f32
    %114 = vector.broadcast %cst_48 : f32 to vector<1x128xf32>
    %115 = arith.subf %114, %113 : vector<1x128xf32>
    %116 = tpu.concatenate %106, %115 in 0 : vector<1x128xf32>, vector<1x128xf32> -> vector<2x128xf32>
    %c0_49 = arith.constant 0 : index
    %c0_50 = arith.constant 0 : index
    %117 = vector.load %arg16[%c0_49, %c0_50] : memref<2x128xf32, #tpu.memory_space<vmem>>, vector<2x128xf32>
    tpu.vector_store %arg16[%c0_49, %c0_50], %116 {strides = array<i32>} : memref<2x128xf32, #tpu.memory_space<vmem>>, vector<2x128xf32>,
    return
  }
  func.func @transform_0(%arg0: i32) -> (i32, i32, i32) {
    %c0_i32 = arith.constant 0 : i32
    %c0_i32_0 = arith.constant 0 : i32
    %c0_i32_1 = arith.constant 0 : i32
    return %arg0, %c0_i32, %c0_i32_0 : i32, i32, i32
  }
  func.func @transform_1(%arg0: i32) -> (i32, i32) {
    %c0_i32 = arith.constant 0 : i32
    %c0_i32_0 = arith.constant 0 : i32
    return %c0_i32, %arg0 : i32, i32
  }
  func.func @transform_2(%arg0: i32) -> (i32, i32) {
    %c0_i32 = arith.constant 0 : i32
    %c0_i32_0 = arith.constant 0 : i32
    %c0_i32_1 = arith.constant 0 : i32
    return %c0_i32, %c0_i32_0 : i32, i32
  }
  func.func @transform_3(%arg0: i32) -> (i32, i32) {
    %c0_i32 = arith.constant 0 : i32
    %c0_i32_0 = arith.constant 0 : i32
    %c0_i32_1 = arith.constant 0 : i32
    return %c0_i32, %c0_i32_0 : i32, i32
  }
  func.func @transform_4(%arg0: i32) -> (i32, i32) {
    %c0_i32 = arith.constant 0 : i32
    %c0_i32_0 = arith.constant 0 : i32
    %c0_i32_1 = arith.constant 0 : i32
    return %c0_i32, %c0_i32_0 : i32, i32
  }
  func.func @transform_5(%arg0: i32) -> (i32, i32) {
    %c0_i32 = arith.constant 0 : i32
    %c0_i32_0 = arith.constant 0 : i32
    %c0_i32_1 = arith.constant 0 : i32
    return %c0_i32, %c0_i32_0 : i32, i32
  }
  func.func @transform_6(%arg0: i32) -> (i32, i32) {
    %c0_i32 = arith.constant 0 : i32
    %c0_i32_0 = arith.constant 0 : i32
    %c0_i32_1 = arith.constant 0 : i32
    return %c0_i32, %c0_i32_0 : i32, i32
  }
  func.func @transform_7(%arg0: i32) -> (i32, i32) {
    %c0_i32 = arith.constant 0 : i32
    %c0_i32_0 = arith.constant 0 : i32
    %c0_i32_1 = arith.constant 0 : i32
    return %c0_i32, %c0_i32_0 : i32, i32
  }
  func.func @transform_8(%arg0: i32) -> (i32, i32) {
    %c0_i32 = arith.constant 0 : i32
    %c0_i32_0 = arith.constant 0 : i32
    %c0_i32_1 = arith.constant 0 : i32
    return %c0_i32, %c0_i32_0 : i32, i32
  }
  func.func @transform_9(%arg0: i32) -> (i32, i32) {
    %c0_i32 = arith.constant 0 : i32
    %c0_i32_0 = arith.constant 0 : i32
    %c0_i32_1 = arith.constant 0 : i32
    return %c0_i32, %c0_i32_0 : i32, i32
  }
  func.func @transform_10(%arg0: i32) -> (i32, i32) {
    %c0_i32 = arith.constant 0 : i32
    %c0_i32_0 = arith.constant 0 : i32
    %c0_i32_1 = arith.constant 0 : i32
    return %c0_i32, %c0_i32_0 : i32, i32
  }
  func.func @transform_11(%arg0: i32) -> (i32, i32) {
    %c0_i32 = arith.constant 0 : i32
    %c0_i32_0 = arith.constant 0 : i32
    %c0_i32_1 = arith.constant 0 : i32
    return %c0_i32, %c0_i32_0 : i32, i32
  }
  func.func @transform_12(%arg0: i32) -> (i32, i32) {
    %c0_i32 = arith.constant 0 : i32
    %c0_i32_0 = arith.constant 0 : i32
    %c0_i32_1 = arith.constant 0 : i32
    return %c0_i32, %c0_i32_0 : i32, i32
  }
  func.func @transform_13(%arg0: i32) -> (i32, i32) {
    %c0_i32 = arith.constant 0 : i32
    %c0_i32_0 = arith.constant 0 : i32
    %c0_i32_1 = arith.constant 0 : i32
    return %c0_i32, %c0_i32_0 : i32, i32
  }
  func.func @transform_14(%arg0: i32) -> (i32, i32) {
    %c0_i32 = arith.constant 0 : i32
    %c0_i32_0 = arith.constant 0 : i32
    %c0_i32_1 = arith.constant 0 : i32
    return %c0_i32, %c0_i32_0 : i32, i32
  }
  func.func @transform_15(%arg0: i32) -> (i32, i32) {
    %c0_i32 = arith.constant 0 : i32
    %c0_i32_0 = arith.constant 0 : i32
    return %c0_i32, %arg0 : i32, i32
  }
}

</mosaic_0001>

<llo_original>
// kernel: tpu_custom_call.1
$region0: #{tpu_custom_call.1}
  #allocation0 [shape = 'u32[]', space=smem, size = 0x4, offset = 0x4, fixed_abs, tag = 'smem constant byte address 0x4 - core index']
  #allocation1 [shape = 'u32[144,128]{1,0:T(1,128)}', space=vmem, size = 0x12000, scoped, tag = 'internal scratch']
  %s0 = inlined_call_operand.vmem [shape: f32[1,8,640], index: 0, kind: input, shape index: {}]
  %s1 = inlined_call_operand.vmem [shape: f32[8,128], index: 1, kind: input, shape index: {}]
  %s2 = inlined_call_operand.vmem [shape: f32[64,8], index: 2, kind: input, shape index: {}]
  %s3 = inlined_call_operand.vmem [shape: f32[64,1], index: 3, kind: input, shape index: {}]
  %s4 = inlined_call_operand.vmem [shape: f32[128,64], index: 4, kind: input, shape index: {}]
  %s5 = inlined_call_operand.vmem [shape: f32[128,1], index: 5, kind: input, shape index: {}]
  %s6 = inlined_call_operand.vmem [shape: f32[64,128], index: 6, kind: input, shape index: {}]
  %s7 = inlined_call_operand.vmem [shape: f32[64,4], index: 7, kind: input, shape index: {}]
  %s8 = inlined_call_operand.vmem [shape: f32[64,1], index: 8, kind: input, shape index: {}]
  %s9 = inlined_call_operand.vmem [shape: f32[128,64], index: 9, kind: input, shape index: {}]
  %s10 = inlined_call_operand.vmem [shape: f32[128,1], index: 10, kind: input, shape index: {}]
  %s11 = inlined_call_operand.vmem [shape: f32[64,128], index: 11, kind: input, shape index: {}]
  %s12 = inlined_call_operand.vmem [shape: f32[64,1], index: 12, kind: input, shape index: {}]
  %s13 = inlined_call_operand.vmem [shape: f32[4,64], index: 13, kind: input, shape index: {}]
  %s14 = inlined_call_operand.vmem [shape: f32[4,1], index: 14, kind: input, shape index: {}]
  %s15 = inlined_call_operand.hbm [shape: f32[2,128], index: 15, kind: output, shape index: {}]
  %s16 = sld [smem:[#allocation0]]
  $region70: #{tpu_custom_call.1} parent=0
    _
  %s18 = ssub.s32 1, %s16
  %s19 = scalar_select 0, %s18, %s16
  $region1: #{tpu_custom_call.1} parent=0
    #allocation2 [shape = 'u8[1024]{0}', space=vmem, size = 0x400, scoped, tag = 'output window, operand 0, single buffered']
    #allocation3 [shape = 's32[1]{0}', space=sflag, size = 0x4, scoped, tag = 'scoped memory for tpu_custom_call.1']
    %20 = vsyncpa [#allocation3], 0
    // Predicated region
    $region2: #{tpu_custom_call.1} parent=1 // pred_check
      _
    $region3: #{tpu_custom_call.1} parent=1 // pred_check_branch
      %22 = sbr.rel (0) target = $region5
    $region4: #{tpu_custom_call.1} parent=1 // pred_region
      _
    $region5: #{tpu_custom_call.1} parent=1 // pred_fallthru
      _
    // Predicated region
    $region6: #{tpu_custom_call.1} parent=1 // pred_check
      _
    $region7: #{tpu_custom_call.1} parent=1 // pred_check_branch
      %24 = sbr.rel (0) target = $region9
    $region8: #{tpu_custom_call.1} parent=1 // pred_region
      _
    $region9: #{tpu_custom_call.1} parent=1 // pred_fallthru
      _
    // Predicated region
    $region10: #{tpu_custom_call.1} parent=1 // pred_check
      _
    $region11: #{tpu_custom_call.1} parent=1 // pred_check_branch
      %26 = sbr.rel (0) target = $region13
    $region12: #{tpu_custom_call.1} parent=1 // pred_region
      _
    $region13: #{tpu_custom_call.1} parent=1 // pred_fallthru
      _
    // Predicated region
    $region14: #{tpu_custom_call.1} parent=1 // pred_check
      _
    $region15: #{tpu_custom_call.1} parent=1 // pred_check_branch
      %28 = sbr.rel (0) target = $region17
    $region16: #{tpu_custom_call.1} parent=1 // pred_region
      _
    $region17: #{tpu_custom_call.1} parent=1 // pred_fallthru
      _
    // Predicated region
    $region18: #{tpu_custom_call.1} parent=1 // pred_check
      _
    $region19: #{tpu_custom_call.1} parent=1 // pred_check_branch
      %30 = sbr.rel (0) target = $region21
    $region20: #{tpu_custom_call.1} parent=1 // pred_region
      _
    $region21: #{tpu_custom_call.1} parent=1 // pred_fallthru
      _
    // Predicated region
    $region22: #{tpu_custom_call.1} parent=1 // pred_check
      _
    $region23: #{tpu_custom_call.1} parent=1 // pred_check_branch
      %32 = sbr.rel (0) target = $region25
    $region24: #{tpu_custom_call.1} parent=1 // pred_region
      _
    $region25: #{tpu_custom_call.1} parent=1 // pred_fallthru
      _
    // Predicated region
    $region26: #{tpu_custom_call.1} parent=1 // pred_check
      _
    $region27: #{tpu_custom_call.1} parent=1 // pred_check_branch
      %34 = sbr.rel (0) target = $region29
    $region28: #{tpu_custom_call.1} parent=1 // pred_region
      _
    $region29: #{tpu_custom_call.1} parent=1 // pred_fallthru
      _
    // Predicated region
    $region30: #{tpu_custom_call.1} parent=1 // pred_check
      _
    $region31: #{tpu_custom_call.1} parent=1 // pred_check_branch
      %36 = sbr.rel (0) target = $region33
    $region32: #{tpu_custom_call.1} parent=1 // pred_region
      _
    $region33: #{tpu_custom_call.1} parent=1 // pred_fallthru
      _
    // Predicated region
    $region34: #{tpu_custom_call.1} parent=1 // pred_check
      _
    $region35: #{tpu_custom_call.1} parent=1 // pred_check_branch
      %38 = sbr.rel (0) target = $region37
    $region36: #{tpu_custom_call.1} parent=1 // pred_region
      _
    $region37: #{tpu_custom_call.1} parent=1 // pred_fallthru
      _
    // Predicated region
    $region38: #{tpu_custom_call.1} parent=1 // pred_check
      _
    $region39: #{tpu_custom_call.1} parent=1 // pred_check_branch
      %40 = sbr.rel (0) target = $region41
    $region40: #{tpu_custom_call.1} parent=1 // pred_region
      _
    $region41: #{tpu_custom_call.1} parent=1 // pred_fallthru
      _
    // Predicated region
    $region42: #{tpu_custom_call.1} parent=1 // pred_check
      _
    $region43: #{tpu_custom_call.1} parent=1 // pred_check_branch
      %42 = sbr.rel (0) target = $region45
    $region44: #{tpu_custom_call.1} parent=1 // pred_region
      _
    $region45: #{tpu_custom_call.1} parent=1 // pred_fallthru
      _
    // Predicated region
    $region46: #{tpu_custom_call.1} parent=1 // pred_check
      _
    $region47: #{tpu_custom_call.1} parent=1 // pred_check_branch
      %44 = sbr.rel (0) target = $region49
    $region48: #{tpu_custom_call.1} parent=1 // pred_region
      _
    $region49: #{tpu_custom_call.1} parent=1 // pred_fallthru
      _
    // Predicated region
    $region50: #{tpu_custom_call.1} parent=1 // pred_check
      _
    $region51: #{tpu_custom_call.1} parent=1 // pred_check_branch
      %46 = sbr.rel (0) target = $region53
    $region52: #{tpu_custom_call.1} parent=1 // pred_region
      _
    $region53: #{tpu_custom_call.1} parent=1 // pred_fallthru
      _
    // Predicated region
    $region54: #{tpu_custom_call.1} parent=1 // pred_check
      _
    $region55: #{tpu_custom_call.1} parent=1 // pred_check_branch
      %48 = sbr.rel (0) target = $region57
    $region56: #{tpu_custom_call.1} parent=1 // pred_region
      _
    $region57: #{tpu_custom_call.1} parent=1 // pred_fallthru
      _
    // Predicated region
    $region58: #{tpu_custom_call.1} parent=1 // pred_check
      _
    $region59: #{tpu_custom_call.1} parent=1 // pred_check_branch
      %50 = sbr.rel (0) target = $region61
    $region60: #{tpu_custom_call.1} parent=1 // pred_region
      _
    $region61: #{tpu_custom_call.1} parent=1 // pred_fallthru
      _
    %v51 = vld [vmem:[%s0] sm:$0xff]
    %v52 = vld [vmem:[%s0 + $0x8] sm:$0xff]
    %v53 = vld [vmem:[%s0 + $0x10] sm:$0xff]
    %v54 = vld [vmem:[%s0 + $0x18] sm:$0xff]
    %v55 = vld [vmem:[%s0 + $0x20] sm:$0xff]
    %v56 = vmul.f32 %v51, %v51
    %v57 = vmul.f32 %v52, %v52
    %v58 = vmul.f32 %v53, %v53
    %v59 = vmul.f32 %v54, %v54
    %v60 = vmul.f32 %v55, %v55
    %v66 = vrot.slane %v56, 1
    %v67 = vrot.slane %v57, 1
    %v68 = vrot.slane %v58, 1
    %v69 = vrot.slane %v59, 1
    %v70 = vrot.slane %v60, 1
    %v76 = vadd.f32 %v56, %v66
    %v77 = vadd.f32 %v57, %v67
    %v78 = vadd.f32 %v58, %v68
    %v79 = vadd.f32 %v59, %v69
    %v80 = vadd.f32 %v60, %v70
    %vm81 = vcmp.lt.f32.partialorder %v76, 1.0
    %vm82 = vcmp.lt.f32.partialorder %v77, 1.0
    %vm83 = vcmp.lt.f32.partialorder %v78, 1.0
    %vm84 = vcmp.lt.f32.partialorder %v79, 1.0
    %vm85 = vcmp.lt.f32.partialorder %v80, 1.0
    %v86 = vsel %vm81, 1, 0
    %v87 = vsel %vm82, 1, 0
    %v88 = vsel %vm83, 1, 0
    %v89 = vsel %vm84, 1, 0
    %v90 = vsel %vm85, 1, 0
    %v91 = vcvt.s32.f32 %v86
    %v92 = vcvt.s32.f32 %v87
    %v93 = vcvt.s32.f32 %v88
    %v94 = vcvt.s32.f32 %v89
    %v95 = vcvt.s32.f32 %v90
    %v96 = vld [vmem:[%s2] sm:$0xff]
    %v97 = vld [vmem:[%s2 + $0x8] sm:$0xff]
    %v98 = vld [vmem:[%s2 + $0x10] sm:$0xff]
    %v99 = vld [vmem:[%s2 + $0x18] sm:$0xff]
    %v100 = vld [vmem:[%s2 + $0x20] sm:$0xff]
    %v101 = vld [vmem:[%s2 + $0x28] sm:$0xff]
    %v102 = vld [vmem:[%s2 + $0x30] sm:$0xff]
    %v103 = vld [vmem:[%s2 + $0x38] sm:$0xff]
    %v104 = vld [vmem:[%s3] sm:$0xff]
    %v105 = vld [vmem:[%s3 + $0x8] sm:$0xff]
    %v106 = vld [vmem:[%s3 + $0x10] sm:$0xff]
    %v107 = vld [vmem:[%s3 + $0x18] sm:$0xff]
    %v108 = vld [vmem:[%s3 + $0x20] sm:$0xff]
    %v109 = vld [vmem:[%s3 + $0x28] sm:$0xff]
    %v110 = vld [vmem:[%s3 + $0x30] sm:$0xff]
    %v111 = vld [vmem:[%s3 + $0x38] sm:$0xff]
    %113 = vset.pattern.permute.xlu0 0
    %114 = vperm.xlu0 %113, %v104
    %v115 = vpop.permute.xlu0 %114
    %118 = vset.pattern.permute.xlu0 0
    %119 = vperm.xlu0 %118, %v105
    %v120 = vpop.permute.xlu0 %119
    %123 = vset.pattern.permute.xlu0 0
    %124 = vperm.xlu0 %123, %v106
    %v125 = vpop.permute.xlu0 %124
    %128 = vset.pattern.permute.xlu0 0
    %129 = vperm.xlu0 %128, %v107
    %v130 = vpop.permute.xlu0 %129
    %133 = vset.pattern.permute.xlu0 0
    %134 = vperm.xlu0 %133, %v108
    %v135 = vpop.permute.xlu0 %134
    %138 = vset.pattern.permute.xlu0 0
    %139 = vperm.xlu0 %138, %v109
    %v140 = vpop.permute.xlu0 %139
    %143 = vset.pattern.permute.xlu0 0
    %144 = vperm.xlu0 %143, %v110
    %v145 = vpop.permute.xlu0 %144
    %148 = vset.pattern.permute.xlu0 0
    %149 = vperm.xlu0 %148, %v111
    %v150 = vpop.permute.xlu0 %149
    %vm152 = vcmask 64512
    %v154 = vsel %vm152, %v96, 0
    %v157 = vsel %vm152, %v97, 0
    %v160 = vsel %vm152, %v98, 0
    %v163 = vsel %vm152, %v99, 0
    %v166 = vsel %vm152, %v100, 0
    %v169 = vsel %vm152, %v101, 0
    %v172 = vsel %vm152, %v102, 0
    %v175 = vsel %vm152, %v103, 0
    %177 = vmatprep.subr.mxu0 %v52
    %178 = vmatpush1.msra.mxu0 %v51
    %179 = vmatprep.subr.mxu0 0.0
    %180 = vmatpush1.msra.mxu0 0.0
    %181 = vmatprep.subr.mxu0 0.0
    %182 = vmatpush1.msra.mxu0 0.0
    %183 = vmatprep.subr.mxu0 0.0
    %184 = vmatpush1.msra.mxu0 0.0
    %185 = vmatprep.subr.mxu0 0.0
    %186 = vmatpush1.msra.mxu0 0.0
    %187 = vmatprep.subr.mxu0 0.0
    %188 = vmatpush1.msra.mxu0 0.0
    %189 = vmatprep.subr.mxu0 0.0
    %190 = vmatpush1.msra.mxu0 0.0
    %191 = vmatprep.subr.mxu0 0.0
    %192 = vmatpush1.msra.mxu0 0.0
    %193 = vmatprep.subr.mxu0 0.0
    %194 = vmatpush1.msra.mxu0 0.0
    %195 = vmatprep.subr.mxu0 0.0
    %196 = vmatpush1.msra.mxu0 0.0
    %197 = vmatprep.subr.mxu0 0.0
    %198 = vmatpush1.msra.mxu0 0.0
    %199 = vmatprep.subr.mxu0 0.0
    %200 = vmatpush1.msra.mxu0 0.0
    %201 = vmatprep.subr.mxu0 0.0
    %202 = vmatpush1.msra.mxu0 0.0
    %203 = vmatprep.subr.mxu0 0.0
    %204 = vmatpush1.msra.mxu0 0.0
    %205 = vmatprep.subr.mxu0 0.0
    %206 = vmatpush1.msra.mxu0 0.0
    %207 = vmatprep.subr.mxu0 0.0
    %208 = vmatpush1.msra.mxu0 0.0
    %209 = vmatprep.subr.mxu0 0.0
    %210 = vmatpush1.msra.mxu0 0.0
    %211 = vmatprep.subr.mxu0 0.0
    %212 = vmatpush1.msra.mxu0 0.0
    %213 = vmatprep.subr.mxu0 0.0
    %214 = vmatpush1.msra.mxu0 0.0
    %215 = vmatprep.subr.mxu0 0.0
    %216 = vmatpush1.msra.mxu0 0.0
    %217 = vmatprep.subr.mxu0 0.0
    %218 = vmatpush1.msra.mxu0 0.0
    %219 = vmatprep.subr.mxu0 0.0
    %220 = vmatpush1.msra.mxu0 0.0
    %221 = vmatprep.subr.mxu0 0.0
    %222 = vmatpush1.msra.mxu0 0.0
    %223 = vmatprep.subr.mxu0 0.0
    %224 = vmatpush1.msra.mxu0 0.0
    %225 = vmatprep.subr.mxu0 0.0
    %226 = vmatpush1.msra.mxu0 0.0
    %227 = vmatprep.subr.mxu0 0.0
    %228 = vmatpush1.msra.mxu0 0.0
    %229 = vmatprep.subr.mxu0 0.0
    %230 = vmatpush1.msra.mxu0 0.0
    %231 = vmatprep.subr.mxu0 0.0
    %232 = vmatpush1.msra.mxu0 0.0
    %233 = vmatprep.subr.mxu0 0.0
    %234 = vmatpush1.msra.mxu0 0.0
    %235 = vmatprep.subr.mxu0 0.0
    %236 = vmatpush1.msra.mxu0 0.0
    %237 = vmatprep.subr.mxu0 0.0
    %238 = vmatpush1.msra.mxu0 0.0
    %239 = vmatprep.subr.mxu0 0.0
    %240 = vmatpush1.msra.mxu0 0.0
    %241 = vmatprep.mubr.f32.mxu0 0.0
    %242 = vmatmul.mubr.f32.gmra.mrb[0].mxu0 %v154
    %v243 = vpop.f32.mrb[0].mxu0
    %v244 = vadd.f32 %v115, %v243
    %v245 = vpop.f32.mrb[0].mxu0
    %v246 = vadd.f32 %v115, %v245
    %247 = vmatprep.mubr.f32.mxu0 0.0
    %248 = vmatmul.mubr.f32.gmra.mrb[0].mxu0 %v157
    %v249 = vpop.f32.mrb[0].mxu0
    %v250 = vadd.f32 %v120, %v249
    %v251 = vpop.f32.mrb[0].mxu0
    %v252 = vadd.f32 %v120, %v251
    %253 = vmatprep.mubr.f32.mxu0 0.0
    %254 = vmatmul.mubr.f32.gmra.mrb[0].mxu0 %v160
    %v255 = vpop.f32.mrb[0].mxu0
    %v256 = vadd.f32 %v125, %v255
    %v257 = vpop.f32.mrb[0].mxu0
    %v258 = vadd.f32 %v125, %v257
    %259 = vmatprep.mubr.f32.mxu0 0.0
    %260 = vmatmul.mubr.f32.gmra.mrb[0].mxu0 %v163
    %v261 = vpop.f32.mrb[0].mxu0
    %v262 = vadd.f32 %v130, %v261
    %v263 = vpop.f32.mrb[0].mxu0
    %v264 = vadd.f32 %v130, %v263
    %265 = vmatprep.mubr.f32.mxu0 0.0
    %266 = vmatmul.mubr.f32.gmra.mrb[0].mxu0 %v166
    %v267 = vpop.f32.mrb[0].mxu0
    %v268 = vadd.f32 %v135, %v267
    %v269 = vpop.f32.mrb[0].mxu0
    %v270 = vadd.f32 %v135, %v269
    %271 = vmatprep.mubr.f32.mxu0 0.0
    %272 = vmatmul.mubr.f32.gmra.mrb[0].mxu0 %v169
    %v273 = vpop.f32.mrb[0].mxu0
    %v274 = vadd.f32 %v140, %v273
    %v275 = vpop.f32.mrb[0].mxu0
    %v276 = vadd.f32 %v140, %v275
    %277 = vmatprep.mubr.f32.mxu0 0.0
    %278 = vmatmul.mubr.f32.gmra.mrb[0].mxu0 %v172
    %v279 = vpop.f32.mrb[0].mxu0
    %v280 = vadd.f32 %v145, %v279
    %v281 = vpop.f32.mrb[0].mxu0
    %v282 = vadd.f32 %v145, %v281
    %283 = vmatprep.mubr.f32.mxu0 0.0
    %284 = vmatmul.mubr.f32.gmra.mrb[0].mxu0 %v175
    %v285 = vpop.f32.mrb[0].mxu0
    %v286 = vadd.f32 %v150, %v285
    %v287 = vpop.f32.mrb[0].mxu0
    %v288 = vadd.f32 %v150, %v287
    %289 = vdwg.mxu0
    %290 = vmatprep.subr.mxu0 %v54
    %291 = vmatpush1.msra.mxu0 %v53
    %292 = vmatprep.subr.mxu0 0.0
    %293 = vmatpush1.msra.mxu0 0.0
    %294 = vmatprep.subr.mxu0 0.0
    %295 = vmatpush1.msra.mxu0 0.0
    %296 = vmatprep.subr.mxu0 0.0
    %297 = vmatpush1.msra.mxu0 0.0
    %298 = vmatprep.subr.mxu0 0.0
    %299 = vmatpush1.msra.mxu0 0.0
    %300 = vmatprep.subr.mxu0 0.0
    %301 = vmatpush1.msra.mxu0 0.0
    %302 = vmatprep.subr.mxu0 0.0
    %303 = vmatpush1.msra.mxu0 0.0
    %304 = vmatprep.subr.mxu0 0.0
    %305 = vmatpush1.msra.mxu0 0.0
    %306 = vmatprep.subr.mxu0 0.0
    %307 = vmatpush1.msra.mxu0 0.0
    %308 = vmatprep.subr.mxu0 0.0
    %309 = vmatpush1.msra.mxu0 0.0
    %310 = vmatprep.subr.mxu0 0.0
    %311 = vmatpush1.msra.mxu0 0.0
    %312 = vmatprep.subr.mxu0 0.0
    %313 = vmatpush1.msra.mxu0 0.0
    %314 = vmatprep.subr.mxu0 0.0
    %315 = vmatpush1.msra.mxu0 0.0
    %316 = vmatprep.subr.mxu0 0.0
    %317 = vmatpush1.msra.mxu0 0.0
    %318 = vmatprep.subr.mxu0 0.0
    %319 = vmatpush1.msra.mxu0 0.0
    %320 = vmatprep.subr.mxu0 0.0
    %321 = vmatpush1.msra.mxu0 0.0
    %322 = vmatprep.subr.mxu0 0.0
    %323 = vmatpush1.msra.mxu0 0.0
    %324 = vmatprep.subr.mxu0 0.0
    %325 = vmatpush1.msra.mxu0 0.0
    %326 = vmatprep.subr.mxu0 0.0
    %327 = vmatpush1.msra.mxu0 0.0
    %328 = vmatprep.subr.mxu0 0.0
    %329 = vmatpush1.msra.mxu0 0.0
    %330 = vmatprep.subr.mxu0 0.0
    %331 = vmatpush1.msra.mxu0 0.0
    %332 = vmatprep.subr.mxu0 0.0
    %333 = vmatpush1.msra.mxu0 0.0
    %334 = vmatprep.subr.mxu0 0.0
    %335 = vmatpush1.msra.mxu0 0.0
    %336 = vmatprep.subr.mxu0 0.0
    %337 = vmatpush1.msra.mxu0 0.0
    %338 = vmatprep.subr.mxu0 0.0
    %339 = vmatpush1.msra.mxu0 0.0
    %340 = vmatprep.subr.mxu0 0.0
    %341 = vmatpush1.msra.mxu0 0.0
    %342 = vmatprep.subr.mxu0 0.0
    %343 = vmatpush1.msra.mxu0 0.0
    %344 = vmatprep.subr.mxu0 0.0
    %345 = vmatpush1.msra.mxu0 0.0
    %346 = vmatprep.subr.mxu0 0.0
    %347 = vmatpush1.msra.mxu0 0.0
    %348 = vmatprep.subr.mxu0 0.0
    %349 = vmatpush1.msra.mxu0 0.0
    %350 = vmatprep.subr.mxu0 0.0
    %351 = vmatpush1.msra.mxu0 0.0
    %352 = vmatprep.subr.mxu0 0.0
    %353 = vmatpush1.msra.mxu0 0.0
    %354 = vmatprep.mubr.f32.mxu0 0.0
    %355 = vmatmul.mubr.f32.gmra.mrb[0].mxu0 %v154
    %v356 = vpop.f32.mrb[0].mxu0
    %v357 = vadd.f32 %v115, %v356
    %v358 = vpop.f32.mrb[0].mxu0
    %v359 = vadd.f32 %v115, %v358
    %360 = vmatprep.mubr.f32.mxu0 0.0
    %361 = vmatmul.mubr.f32.gmra.mrb[0].mxu0 %v157
    %v362 = vpop.f32.mrb[0].mxu0
    %v363 = vadd.f32 %v120, %v362
    %v364 = vpop.f32.mrb[0].mxu0
    %v365 = vadd.f32 %v120, %v364
    %366 = vmatprep.mubr.f32.mxu0 0.0
    %367 = vmatmul.mubr.f32.gmra.mrb[0].mxu0 %v160
    %v368 = vpop.f32.mrb[0].mxu0
    %v369 = vadd.f32 %v125, %v368
    %v370 = vpop.f32.mrb[0].mxu0
    %v371 = vadd.f32 %v125, %v370
    %372 = vmatprep.mubr.f32.mxu0 0.0
    %373 = vmatmul.mubr.f32.gmra.mrb[0].mxu0 %v163
    %v374 = vpop.f32.mrb[0].mxu0
    %v375 = vadd.f32 %v130, %v374
    %v376 = vpop.f32.mrb[0].mxu0
    %v377 = vadd.f32 %v130, %v376
    %378 = vmatprep.mubr.f32.mxu0 0.0
    %379 = vmatmul.mubr.f32.gmra.mrb[0].mxu0 %v166
    %v380 = vpop.f32.mrb[0].mxu0
    %v381 = vadd.f32 %v135, %v380
    %v382 = vpop.f32.mrb[0].mxu0
    %v383 = vadd.f32 %v135, %v382
    %384 = vmatprep.mubr.f32.mxu0 0.0
    %385 = vmatmul.mubr.f32.gmra.mrb[0].mxu0 %v169
    %v386 = vpop.f32.mrb[0].mxu0
    %v387 = vadd.f32 %v140, %v386
    %v388 = vpop.f32.mrb[0].mxu0
    %v389 = vadd.f32 %v140, %v388
    %390 = vmatprep.mubr.f32.mxu0 0.0
    %391 = vmatmul.mubr.f32.gmra.mrb[0].mxu0 %v172
    %v392 = vpop.f32.mrb[0].mxu0
    %v393 = vadd.f32 %v145, %v392
    %v394 = vpop.f32.mrb[0].mxu0
    %v395 = vadd.f32 %v145, %v394
    %396 = vmatprep.mubr.f32.mxu0 0.0
    %397 = vmatmul.mubr.f32.gmra.mrb[0].mxu0 %v175
    %v398 = vpop.f32.mrb[0].mxu0
    %v399 = vadd.f32 %v150, %v398
    %v400 = vpop.f32.mrb[0].mxu0
    %v401 = vadd.f32 %v150, %v400
    %402 = vdwg.mxu0
    %403 = vmatprep.subr.mxu0 0.0
    %404 = vmatpush1.msra.mxu0 %v55
    %405 = vmatprep.subr.mxu0 0.0
    %406 = vmatpush1.msra.mxu0 0.0
    %407 = vmatprep.subr.mxu0 0.0
    %408 = vmatpush1.msra.mxu0 0.0
    %409 = vmatprep.subr.mxu0 0.0
    %410 = vmatpush1.msra.mxu0 0.0
    %411 = vmatprep.subr.mxu0 0.0
    %412 = vmatpush1.msra.mxu0 0.0
    %413 = vmatprep.subr.mxu0 0.0
    %414 = vmatpush1.msra.mxu0 0.0
    %415 = vmatprep.subr.mxu0 0.0
    %416 = vmatpush1.msra.mxu0 0.0
    %417 = vmatprep.subr.mxu0 0.0
    %418 = vmatpush1.msra.mxu0 0.0
    %419 = vmatprep.subr.mxu0 0.0
    %420 = vmatpush1.msra.mxu0 0.0
    %421 = vmatprep.subr.mxu0 0.0
    %422 = vmatpush1.msra.mxu0 0.0
    %423 = vmatprep.subr.mxu0 0.0
    %424 = vmatpush1.msra.mxu0 0.0
    %425 = vmatprep.subr.mxu0 0.0
    %426 = vmatpush1.msra.mxu0 0.0
    %427 = vmatprep.subr.mxu0 0.0
    %428 = vmatpush1.msra.mxu0 0.0
    %429 = vmatprep.subr.mxu0 0.0
    %430 = vmatpush1.msra.mxu0 0.0
    %431 = vmatprep.subr.mxu0 0.0
    %432 = vmatpush1.msra.mxu0 0.0
    %433 = vmatprep.subr.mxu0 0.0
    %434 = vmatpush1.msra.mxu0 0.0
    %435 = vmatprep.subr.mxu0 0.0
    %436 = vmatpush1.msra.mxu0 0.0
    %437 = vmatprep.subr.mxu0 0.0
    %438 = vmatpush1.msra.mxu0 0.0
    %439 = vmatprep.subr.mxu0 0.0
    %440 = vmatpush1.msra.mxu0 0.0
    %441 = vmatprep.subr.mxu0 0.0
    %442 = vmatpush1.msra.mxu0 0.0
    %443 = vmatprep.subr.mxu0 0.0
    %444 = vmatpush1.msra.mxu0 0.0
    %445 = vmatprep.subr.mxu0 0.0
    %446 = vmatpush1.msra.mxu0 0.0
    %447 = vmatprep.subr.mxu0 0.0
    %448 = vmatpush1.msra.mxu0 0.0
    %449 = vmatprep.subr.mxu0 0.0
    %450 = vmatpush1.msra.mxu0 0.0
    %451 = vmatprep.subr.mxu0 0.0
    %452 = vmatpush1.msra.mxu0 0.0
    %453 = vmatprep.subr.mxu0 0.0
    %454 = vmatpush1.msra.mxu0 0.0
    %455 = vmatprep.subr.mxu0 0.0
    %456 = vmatpush1.msra.mxu0 0.0
    %457 = vmatprep.subr.mxu0 0.0
    %458 = vmatpush1.msra.mxu0 0.0
    %459 = vmatprep.subr.mxu0 0.0
    %460 = vmatpush1.msra.mxu0 0.0
    %461 = vmatprep.subr.mxu0 0.0
    %462 = vmatpush1.msra.mxu0 0.0
    %463 = vmatprep.subr.mxu0 0.0
    %464 = vmatpush1.msra.mxu0 0.0
    %465 = vmatprep.subr.mxu0 0.0
    %466 = vmatpush1.msra.mxu0 0.0
    %467 = vmatprep.mubr.f32.mxu0 0.0
    %468 = vmatmul.mubr.f32.gmra.mrb[0].mxu0 %v154
    %v469 = vpop.f32.mrb[0].mxu0
    %v470 = vadd.f32 %v115, %v469
    %v471 = vpop.f32.mrb[0].mxu0
    %472 = vmatprep.mubr.f32.mxu0 0.0
    %473 = vmatmul.mubr.f32.gmra.mrb[0].mxu0 %v157
    %v474 = vpop.f32.mrb[0].mxu0
    %v475 = vadd.f32 %v120, %v474
    %v476 = vpop.f32.mrb[0].mxu0
    %477 = vmatprep.mubr.f32.mxu0 0.0
    %478 = vmatmul.mubr.f32.gmra.mrb[0].mxu0 %v160
    %v479 = vpop.f32.mrb[0].mxu0
    %v480 = vadd.f32 %v125, %v479
    %v481 = vpop.f32.mrb[0].mxu0
    %482 = vmatprep.mubr.f32.mxu0 0.0
    %483 = vmatmul.mubr.f32.gmra.mrb[0].mxu0 %v163
    %v484 = vpop.f32.mrb[0].mxu0
    %v485 = vadd.f32 %v130, %v484
    %v486 = vpop.f32.mrb[0].mxu0
    %487 = vmatprep.mubr.f32.mxu0 0.0
    %488 = vmatmul.mubr.f32.gmra.mrb[0].mxu0 %v166
    %v489 = vpop.f32.mrb[0].mxu0
    %v490 = vadd.f32 %v135, %v489
    %v491 = vpop.f32.mrb[0].mxu0
    %492 = vmatprep.mubr.f32.mxu0 0.0
    %493 = vmatmul.mubr.f32.gmra.mrb[0].mxu0 %v169
    %v494 = vpop.f32.mrb[0].mxu0
    %v495 = vadd.f32 %v140, %v494
    %v496 = vpop.f32.mrb[0].mxu0
    %497 = vmatprep.mubr.f32.mxu0 0.0
    %498 = vmatmul.mubr.f32.gmra.mrb[0].mxu0 %v172
    %v499 = vpop.f32.mrb[0].mxu0
    %v500 = vadd.f32 %v145, %v499
    %v501 = vpop.f32.mrb[0].mxu0
    %502 = vmatprep.mubr.f32.mxu0 0.0
    %503 = vmatmul.mubr.f32.gmra.mrb[0].mxu0 %v175
    %v504 = vpop.f32.mrb[0].mxu0
    %v505 = vadd.f32 %v150, %v504
    %v506 = vpop.f32.mrb[0].mxu0
    %507 = vdwg.mxu0
    %v508 = vmax.f32 %v244, 0.0
    %v509 = vmax.f32 %v246, 0.0
    %v510 = vmax.f32 %v357, 0.0
    %v511 = vmax.f32 %v359, 0.0
    %v512 = vmax.f32 %v470, 0.0
    %v513 = vmax.f32 %v250, 0.0
    %v514 = vmax.f32 %v252, 0.0
    %v515 = vmax.f32 %v363, 0.0
    %v516 = vmax.f32 %v365, 0.0
    %v517 = vmax.f32 %v475, 0.0
    %v518 = vmax.f32 %v256, 0.0
    %v519 = vmax.f32 %v258, 0.0
    %v520 = vmax.f32 %v369, 0.0
    %v521 = vmax.f32 %v371, 0.0
    %v522 = vmax.f32 %v480, 0.0
    %v523 = vmax.f32 %v262, 0.0
    %v524 = vmax.f32 %v264, 0.0
    %v525 = vmax.f32 %v375, 0.0
    %v526 = vmax.f32 %v377, 0.0
    %v527 = vmax.f32 %v485, 0.0
    %v528 = vmax.f32 %v268, 0.0
    %v529 = vmax.f32 %v270, 0.0
    %v530 = vmax.f32 %v381, 0.0
    %v531 = vmax.f32 %v383, 0.0
    %v532 = vmax.f32 %v490, 0.0
    %v533 = vmax.f32 %v274, 0.0
    %v534 = vmax.f32 %v276, 0.0
    %v535 = vmax.f32 %v387, 0.0
    %v536 = vmax.f32 %v389, 0.0
    %v537 = vmax.f32 %v495, 0.0
    %v538 = vmax.f32 %v280, 0.0
    %v539 = vmax.f32 %v282, 0.0
    %v540 = vmax.f32 %v393, 0.0
    %v541 = vmax.f32 %v395, 0.0
    %v542 = vmax.f32 %v500, 0.0
    %v543 = vmax.f32 %v286, 0.0
    %v544 = vmax.f32 %v288, 0.0
    %v545 = vmax.f32 %v399, 0.0
    %v546 = vmax.f32 %v401, 0.0
    %v547 = vmax.f32 %v505, 0.0
    %v548 = vld [vmem:[%s4] sm:$0xff]
    %v549 = vld [vmem:[%s4 + $0x8] sm:$0xff]
    %v550 = vld [vmem:[%s4 + $0x10] sm:$0xff]
    %v551 = vld [vmem:[%s4 + $0x18] sm:$0xff]
    %v552 = vld [vmem:[%s4 + $0x20] sm:$0xff]
    %v553 = vld [vmem:[%s4 + $0x28] sm:$0xff]
    %v554 = vld [vmem:[%s4 + $0x30] sm:$0xff]
    %v555 = vld [vmem:[%s4 + $0x38] sm:$0xff]
    %v556 = vld [vmem:[%s4 + $0x40] sm:$0xff]
    %v557 = vld [vmem:[%s4 + $0x48] sm:$0xff]
    %v558 = vld [vmem:[%s4 + $0x50] sm:$0xff]
    %v559 = vld [vmem:[%s4 + $0x58] sm:$0xff]
    %v560 = vld [vmem:[%s4 + $0x60] sm:$0xff]
    %v561 = vld [vmem:[%s4 + $0x68] sm:$0xff]
    %v562 = vld [vmem:[%s4 + $0x70] sm:$0xff]
    %v563 = vld [vmem:[%s4 + $0x78] sm:$0xff]
    %v564 = vld [vmem:[%s5] sm:$0xff]
    %v565 = vld [vmem:[%s5 + $0x8] sm:$0xff]
    %v566 = vld [vmem:[%s5 + $0x10] sm:$0xff]
    %v567 = vld [vmem:[%s5 + $0x18] sm:$0xff]
    %v568 = vld [vmem:[%s5 + $0x20] sm:$0xff]
    %v569 = vld [vmem:[%s5 + $0x28] sm:$0xff]
    %v570 = vld [vmem:[%s5 + $0x30] sm:$0xff]
    %v571 = vld [vmem:[%s5 + $0x38] sm:$0xff]
    %v572 = vld [vmem:[%s5 + $0x40] sm:$0xff]
    %v573 = vld [vmem:[%s5 + $0x48] sm:$0xff]
    %v574 = vld [vmem:[%s5 + $0x50] sm:$0xff]
    %v575 = vld [vmem:[%s5 + $0x58] sm:$0xff]
    %v576 = vld [vmem:[%s5 + $0x60] sm:$0xff]
    %v577 = vld [vmem:[%s5 + $0x68] sm:$0xff]
    %v578 = vld [vmem:[%s5 + $0x70] sm:$0xff]
    %v579 = vld [vmem:[%s5 + $0x78] sm:$0xff]
    %581 = vset.pattern.permute.xlu0 0
    %582 = vperm.xlu0 %581, %v564
    %v583 = vpop.permute.xlu0 %582
    %586 = vset.pattern.permute.xlu0 0
    %587 = vperm.xlu0 %586, %v565
    %v588 = vpop.permute.xlu0 %587
    %591 = vset.pattern.permute.xlu0 0
    %592 = vperm.xlu0 %591, %v566
    %v593 = vpop.permute.xlu0 %592
    %596 = vset.pattern.permute.xlu0 0
    %597 = vperm.xlu0 %596, %v567
    %v598 = vpop.permute.xlu0 %597
    %601 = vset.pattern.permute.xlu0 0
    %602 = vperm.xlu0 %601, %v568
    %v603 = vpop.permute.xlu0 %602
    %606 = vset.pattern.permute.xlu0 0
    %607 = vperm.xlu0 %606, %v569
    %v608 = vpop.permute.xlu0 %607
    %611 = vset.pattern.permute.xlu0 0
    %612 = vperm.xlu0 %611, %v570
    %v613 = vpop.permute.xlu0 %612
    %616 = vset.pattern.permute.xlu0 0
    %617 = vperm.xlu0 %616, %v571
    %v618 = vpop.permute.xlu0 %617
    %621 = vset.pattern.permute.xlu0 0
    %622 = vperm.xlu0 %621, %v572
    %v623 = vpop.permute.xlu0 %622
    %626 = vset.pattern.permute.xlu0 0
    %627 = vperm.xlu0 %626, %v573
    %v628 = vpop.permute.xlu0 %627
    %631 = vset.pattern.permute.xlu0 0
    %632 = vperm.xlu0 %631, %v574
    %v633 = vpop.permute.xlu0 %632
    %636 = vset.pattern.permute.xlu0 0
    %637 = vperm.xlu0 %636, %v575
    %v638 = vpop.permute.xlu0 %637
    %641 = vset.pattern.permute.xlu0 0
    %642 = vperm.xlu0 %641, %v576
    %v643 = vpop.permute.xlu0 %642
    %646 = vset.pattern.permute.xlu0 0
    %647 = vperm.xlu0 %646, %v577
    %v648 = vpop.permute.xlu0 %647
    %651 = vset.pattern.permute.xlu0 0
    %652 = vperm.xlu0 %651, %v578
    %v653 = vpop.permute.xlu0 %652
    %656 = vset.pattern.permute.xlu0 0
    %657 = vperm.xlu0 %656, %v579
    %v658 = vpop.permute.xlu0 %657
    %vm660 = vcmask 523264
    %v662 = vsel %vm660, %v548, 0
    %v665 = vsel %vm660, %v549, 0
    %v668 = vsel %vm660, %v550, 0
    %v671 = vsel %vm660, %v551, 0
    %v674 = vsel %vm660, %v552, 0
    %v677 = vsel %vm660, %v553, 0
    %v680 = vsel %vm660, %v554, 0
    %v683 = vsel %vm660, %v555, 0
    %v686 = vsel %vm660, %v556, 0
    %v689 = vsel %vm660, %v557, 0
    %v692 = vsel %vm660, %v558, 0
    %v695 = vsel %vm660, %v559, 0
    %v698 = vsel %vm660, %v560, 0
    %v701 = vsel %vm660, %v561, 0
    %v704 = vsel %vm660, %v562, 0
    %v707 = vsel %vm660, %v563, 0
    %709 = vmatprep.subr.mxu0 %v509
    %710 = vmatpush1.msra.mxu0 %v508
    %711 = vmatprep.subr.mxu0 %v514
    %712 = vmatpush1.msra.mxu0 %v513
    %713 = vmatprep.subr.mxu0 %v519
    %714 = vmatpush1.msra.mxu0 %v518
    %715 = vmatprep.subr.mxu0 %v524
    %716 = vmatpush1.msra.mxu0 %v523
    %717 = vmatprep.subr.mxu0 %v529
    %718 = vmatpush1.msra.mxu0 %v528
    %719 = vmatprep.subr.mxu0 %v534
    %720 = vmatpush1.msra.mxu0 %v533
    %721 = vmatprep.subr.mxu0 %v539
    %722 = vmatpush1.msra.mxu0 %v538
    %723 = vmatprep.subr.mxu0 %v544
    %724 = vmatpush1.msra.mxu0 %v543
    %725 = vmatprep.subr.mxu0 0.0
    %726 = vmatpush1.msra.mxu0 0.0
    %727 = vmatprep.subr.mxu0 0.0
    %728 = vmatpush1.msra.mxu0 0.0
    %729 = vmatprep.subr.mxu0 0.0
    %730 = vmatpush1.msra.mxu0 0.0
    %731 = vmatprep.subr.mxu0 0.0
    %732 = vmatpush1.msra.mxu0 0.0
    %733 = vmatprep.subr.mxu0 0.0
    %734 = vmatpush1.msra.mxu0 0.0
    %735 = vmatprep.subr.mxu0 0.0
    %736 = vmatpush1.msra.mxu0 0.0
    %737 = vmatprep.subr.mxu0 0.0
    %738 = vmatpush1.msra.mxu0 0.0
    %739 = vmatprep.subr.mxu0 0.0
    %740 = vmatpush1.msra.mxu0 0.0
    %741 = vmatprep.subr.mxu0 0.0
    %742 = vmatpush1.msra.mxu0 0.0
    %743 = vmatprep.subr.mxu0 0.0
    %744 = vmatpush1.msra.mxu0 0.0
    %745 = vmatprep.subr.mxu0 0.0
    %746 = vmatpush1.msra.mxu0 0.0
    %747 = vmatprep.subr.mxu0 0.0
    %748 = vmatpush1.msra.mxu0 0.0
    %749 = vmatprep.subr.mxu0 0.0
    %750 = vmatpush1.msra.mxu0 0.0
    %751 = vmatprep.subr.mxu0 0.0
    %752 = vmatpush1.msra.mxu0 0.0
    %753 = vmatprep.subr.mxu0 0.0
    %754 = vmatpush1.msra.mxu0 0.0
    %755 = vmatprep.subr.mxu0 0.0
    %756 = vmatpush1.msra.mxu0 0.0
    %757 = vmatprep.subr.mxu0 0.0
    %758 = vmatpush1.msra.mxu0 0.0
    %759 = vmatprep.subr.mxu0 0.0
    %760 = vmatpush1.msra.mxu0 0.0
    %761 = vmatprep.subr.mxu0 0.0
    %762 = vmatpush1.msra.mxu0 0.0
    %763 = vmatprep.subr.mxu0 0.0
    %764 = vmatpush1.msra.mxu0 0.0
    %765 = vmatprep.subr.mxu0 0.0
    %766 = vmatpush1.msra.mxu0 0.0
    %767 = vmatprep.subr.mxu0 0.0
    %768 = vmatpush1.msra.mxu0 0.0
    %769 = vmatprep.subr.mxu0 0.0
    %770 = vmatpush1.msra.mxu0 0.0
    %771 = vmatprep.subr.mxu0 0.0
    %772 = vmatpush1.msra.mxu0 0.0
    %773 = vmatprep.mubr.f32.mxu0 0.0
    %774 = vmatmul.mubr.f32.gmra.mrb[0].mxu0 %v662
    %v775 = vpop.f32.mrb[0].mxu0
    %v776 = vadd.f32 %v583, %v775
    %v777 = vpop.f32.mrb[0].mxu0
    %v778 = vadd.f32 %v583, %v777
    %779 = vmatprep.mubr.f32.mxu0 0.0
    %780 = vmatmul.mubr.f32.gmra.mrb[0].mxu0 %v665
    %v781 = vpop.f32.mrb[0].mxu0
    %v782 = vadd.f32 %v588, %v781
    %v783 = vpop.f32.mrb[0].mxu0
    %v784 = vadd.f32 %v588, %v783
    %785 = vmatprep.mubr.f32.mxu0 0.0
    %786 = vmatmul.mubr.f32.gmra.mrb[0].mxu0 %v668
    %v787 = vpop.f32.mrb[0].mxu0
    %v788 = vadd.f32 %v593, %v787
    %v789 = vpop.f32.mrb[0].mxu0
    %v790 = vadd.f32 %v593, %v789
    %791 = vmatprep.mubr.f32.mxu0 0.0
    %792 = vmatmul.mubr.f32.gmra.mrb[0].mxu0 %v671
    %v793 = vpop.f32.mrb[0].mxu0
    %v794 = vadd.f32 %v598, %v793
    %v795 = vpop.f32.mrb[0].mxu0
    %v796 = vadd.f32 %v598, %v795
    %797 = vmatprep.mubr.f32.mxu0 0.0
    %798 = vmatmul.mubr.f32.gmra.mrb[0].mxu0 %v674
    %v799 = vpop.f32.mrb[0].mxu0
    %v800 = vadd.f32 %v603, %v799
    %v801 = vpop.f32.mrb[0].mxu0
    %v802 = vadd.f32 %v603, %v801
    %803 = vmatprep.mubr.f32.mxu0 0.0
    %804 = vmatmul.mubr.f32.gmra.mrb[0].mxu0 %v677
    %v805 = vpop.f32.mrb[0].mxu0
    %v806 = vadd.f32 %v608, %v805
    %v807 = vpop.f32.mrb[0].mxu0
    %v808 = vadd.f32 %v608, %v807
    %809 = vmatprep.mubr.f32.mxu0 0.0
    %810 = vmatmul.mubr.f32.gmra.mrb[0].mxu0 %v680
    %v811 = vpop.f32.mrb[0].mxu0
    %v812 = vadd.f32 %v613, %v811
    %v813 = vpop.f32.mrb[0].mxu0
    %v814 = vadd.f32 %v613, %v813
    %815 = vmatprep.mubr.f32.mxu0 0.0
    %816 = vmatmul.mubr.f32.gmra.mrb[0].mxu0 %v683
    %v817 = vpop.f32.mrb[0].mxu0
    %v818 = vadd.f32 %v618, %v817
    %v819 = vpop.f32.mrb[0].mxu0
    %v820 = vadd.f32 %v618, %v819
    %821 = vmatprep.mubr.f32.mxu0 0.0
    %822 = vmatmul.mubr.f32.gmra.mrb[0].mxu0 %v686
    %v823 = vpop.f32.mrb[0].mxu0
    %v824 = vadd.f32 %v623, %v823
    %v825 = vpop.f32.mrb[0].mxu0
    %v826 = vadd.f32 %v623, %v825
    %827 = vmatprep.mubr.f32.mxu0 0.0
    %828 = vmatmul.mubr.f32.gmra.mrb[0].mxu0 %v689
    %v829 = vpop.f32.mrb[0].mxu0
    %v830 = vadd.f32 %v628, %v829
    %v831 = vpop.f32.mrb[0].mxu0
    %v832 = vadd.f32 %v628, %v831
    %833 = vmatprep.mubr.f32.mxu0 0.0
    %834 = vmatmul.mubr.f32.gmra.mrb[0].mxu0 %v692
    %v835 = vpop.f32.mrb[0].mxu0
    %v836 = vadd.f32 %v633, %v835
    %v837 = vpop.f32.mrb[0].mxu0
    %v838 = vadd.f32 %v633, %v837
    %839 = vmatprep.mubr.f32.mxu0 0.0
    %840 = vmatmul.mubr.f32.gmra.mrb[0].mxu0 %v695
    %v841 = vpop.f32.mrb[0].mxu0
    %v842 = vadd.f32 %v638, %v841
    %v843 = vpop.f32.mrb[0].mxu0
    %v844 = vadd.f32 %v638, %v843
    %845 = vmatprep.mubr.f32.mxu0 0.0
    %846 = vmatmul.mubr.f32.gmra.mrb[0].mxu0 %v698
    %v847 = vpop.f32.mrb[0].mxu0
    %v848 = vadd.f32 %v643, %v847
    %v849 = vpop.f32.mrb[0].mxu0
    %v850 = vadd.f32 %v643, %v849
    %851 = vmatprep.mubr.f32.mxu0 0.0
    %852 = vmatmul.mubr.f32.gmra.mrb[0].mxu0 %v701
    %v853 = vpop.f32.mrb[0].mxu0
    %v854 = vadd.f32 %v648, %v853
    %v855 = vpop.f32.mrb[0].mxu0
    %v856 = vadd.f32 %v648, %v855
    %857 = vmatprep.mubr.f32.mxu0 0.0
    %858 = vmatmul.mubr.f32.gmra.mrb[0].mxu0 %v704
    %v859 = vpop.f32.mrb[0].mxu0
    %v860 = vadd.f32 %v653, %v859
    %v861 = vpop.f32.mrb[0].mxu0
    %v862 = vadd.f32 %v653, %v861
    %863 = vmatprep.mubr.f32.mxu0 0.0
    %864 = vmatmul.mubr.f32.gmra.mrb[0].mxu0 %v707
    %v865 = vpop.f32.mrb[0].mxu0
    %v866 = vadd.f32 %v658, %v865
    %v867 = vpop.f32.mrb[0].mxu0
    %v868 = vadd.f32 %v658, %v867
    %869 = vdwg.mxu0
    %870 = vmatprep.subr.mxu0 %v511
    %871 = vmatpush1.msra.mxu0 %v510
    %872 = vmatprep.subr.mxu0 %v516
    %873 = vmatpush1.msra.mxu0 %v515
    %874 = vmatprep.subr.mxu0 %v521
    %875 = vmatpush1.msra.mxu0 %v520
    %876 = vmatprep.subr.mxu0 %v526
    %877 = vmatpush1.msra.mxu0 %v525
    %878 = vmatprep.subr.mxu0 %v531
    %879 = vmatpush1.msra.mxu0 %v530
    %880 = vmatprep.subr.mxu0 %v536
    %881 = vmatpush1.msra.mxu0 %v535
    %882 = vmatprep.subr.mxu0 %v541
    %883 = vmatpush1.msra.mxu0 %v540
    %884 = vmatprep.subr.mxu0 %v546
    %885 = vmatpush1.msra.mxu0 %v545
    %886 = vmatprep.subr.mxu0 0.0
    %887 = vmatpush1.msra.mxu0 0.0
    %888 = vmatprep.subr.mxu0 0.0
    %889 = vmatpush1.msra.mxu0 0.0
    %890 = vmatprep.subr.mxu0 0.0
    %891 = vmatpush1.msra.mxu0 0.0
    %892 = vmatprep.subr.mxu0 0.0
    %893 = vmatpush1.msra.mxu0 0.0
    %894 = vmatprep.subr.mxu0 0.0
    %895 = vmatpush1.msra.mxu0 0.0
    %896 = vmatprep.subr.mxu0 0.0
    %897 = vmatpush1.msra.mxu0 0.0
    %898 = vmatprep.subr.mxu0 0.0
    %899 = vmatpush1.msra.mxu0 0.0
    %900 = vmatprep.subr.mxu0 0.0
    %901 = vmatpush1.msra.mxu0 0.0
    %902 = vmatprep.subr.mxu0 0.0
    %903 = vmatpush1.msra.mxu0 0.0
    %904 = vmatprep.subr.mxu0 0.0
    %905 = vmatpush1.msra.mxu0 0.0
    %906 = vmatprep.subr.mxu0 0.0
    %907 = vmatpush1.msra.mxu0 0.0
    %908 = vmatprep.subr.mxu0 0.0
    %909 = vmatpush1.msra.mxu0 0.0
    %910 = vmatprep.subr.mxu0 0.0
    %911 = vmatpush1.msra.mxu0 0.0
    %912 = vmatprep.subr.mxu0 0.0
    %913 = vmatpush1.msra.mxu0 0.0
    %914 = vmatprep.subr.mxu0 0.0
    %915 = vmatpush1.msra.mxu0 0.0
    %916 = vmatprep.subr.mxu0 0.0
    %917 = vmatpush1.msra.mxu0 0.0
    %918 = vmatprep.subr.mxu0 0.0
    %919 = vmatpush1.msra.mxu0 0.0
    %920 = vmatprep.subr.mxu0 0.0
    %921 = vmatpush1.msra.mxu0 0.0
    %922 = vmatprep.subr.mxu0 0.0
    %923 = vmatpush1.msra.mxu0 0.0
    %924 = vmatprep.subr.mxu0 0.0
    %925 = vmatpush1.msra.mxu0 0.0
    %926 = vmatprep.subr.mxu0 0.0
    %927 = vmatpush1.msra.mxu0 0.0
    %928 = vmatprep.subr.mxu0 0.0
    %929 = vmatpush1.msra.mxu0 0.0
    %930 = vmatprep.subr.mxu0 0.0
    %931 = vmatpush1.msra.mxu0 0.0
    %932 = vmatprep.subr.mxu0 0.0
    %933 = vmatpush1.msra.mxu0 0.0
    %934 = vmatprep.mubr.f32.mxu0 0.0
    %935 = vmatmul.mubr.f32.gmra.mrb[0].mxu0 %v662
    %v936 = vpop.f32.mrb[0].mxu0
    %v937 = vadd.f32 %v583, %v936
    %v938 = vpop.f32.mrb[0].mxu0
    %v939 = vadd.f32 %v583, %v938
    %940 = vmatprep.mubr.f32.mxu0 0.0
    %941 = vmatmul.mubr.f32.gmra.mrb[0].mxu0 %v665
    %v942 = vpop.f32.mrb[0].mxu0
    %v943 = vadd.f32 %v588, %v942
    %v944 = vpop.f32.mrb[0].mxu0
    %v945 = vadd.f32 %v588, %v944
    %946 = vmatprep.mubr.f32.mxu0 0.0
    %947 = vmatmul.mubr.f32.gmra.mrb[0].mxu0 %v668
    %v948 = vpop.f32.mrb[0].mxu0
    %v949 = vadd.f32 %v593, %v948
    %v950 = vpop.f32.mrb[0].mxu0
    %v951 = vadd.f32 %v593, %v950
    %952 = vmatprep.mubr.f32.mxu0 0.0
    %953 = vmatmul.mubr.f32.gmra.mrb[0].mxu0 %v671
    %v954 = vpop.f32.mrb[0].mxu0
    %v955 = vadd.f32 %v598, %v954
    %v956 = vpop.f32.mrb[0].mxu0
    %v957 = vadd.f32 %v598, %v956
    %958 = vmatprep.mubr.f32.mxu0 0.0
    %959 = vmatmul.mubr.f32.gmra.mrb[0].mxu0 %v674
    %v960 = vpop.f32.mrb[0].mxu0
    %v961 = vadd.f32 %v603, %v960
    %v962 = vpop.f32.mrb[0].mxu0
    %v963 = vadd.f32 %v603, %v962
    %964 = vmatprep.mubr.f32.mxu0 0.0
    %965 = vmatmul.mubr.f32.gmra.mrb[0].mxu0 %v677
    %v966 = vpop.f32.mrb[0].mxu0
    %v967 = vadd.f32 %v608, %v966
    %v968 = vpop.f32.mrb[0].mxu0
    %v969 = vadd.f32 %v608, %v968
    %970 = vmatprep.mubr.f32.mxu0 0.0
    %971 = vmatmul.mubr.f32.gmra.mrb[0].mxu0 %v680
    %v972 = vpop.f32.mrb[0].mxu0
    %v973 = vadd.f32 %v613, %v972
    %v974 = vpop.f32.mrb[0].mxu0
    %v975 = vadd.f32 %v613, %v974
    %976 = vmatprep.mubr.f32.mxu0 0.0
    %977 = vmatmul.mubr.f32.gmra.mrb[0].mxu0 %v683
    %v978 = vpop.f32.mrb[0].mxu0
    %v979 = vadd.f32 %v618, %v978
    %v980 = vpop.f32.mrb[0].mxu0
    %v981 = vadd.f32 %v618, %v980
    %982 = vmatprep.mubr.f32.mxu0 0.0
    %983 = vmatmul.mubr.f32.gmra.mrb[0].mxu0 %v686
    %v984 = vpop.f32.mrb[0].mxu0
    %v985 = vadd.f32 %v623, %v984
    %v986 = vpop.f32.mrb[0].mxu0
    %v987 = vadd.f32 %v623, %v986
    %988 = vmatprep.mubr.f32.mxu0 0.0
    %989 = vmatmul.mubr.f32.gmra.mrb[0].mxu0 %v689
    %v990 = vpop.f32.mrb[0].mxu0
    %v991 = vadd.f32 %v628, %v990
    %v992 = vpop.f32.mrb[0].mxu0
    %v993 = vadd.f32 %v628, %v992
    %994 = vmatprep.mubr.f32.mxu0 0.0
    %995 = vmatmul.mubr.f32.gmra.mrb[0].mxu0 %v692
    %v996 = vpop.f32.mrb[0].mxu0
    %v997 = vadd.f32 %v633, %v996
    %v998 = vpop.f32.mrb[0].mxu0
    %v999 = vadd.f32 %v633, %v998
    %1000 = vmatprep.mubr.f32.mxu0 0.0
    %1001 = vmatmul.mubr.f32.gmra.mrb[0].mxu0 %v695
    %v1002 = vpop.f32.mrb[0].mxu0
    %v1003 = vadd.f32 %v638, %v1002
    %v1004 = vpop.f32.mrb[0].mxu0
    %v1005 = vadd.f32 %v638, %v1004
    %1006 = vmatprep.mubr.f32.mxu0 0.0
    %1007 = vmatmul.mubr.f32.gmra.mrb[0].mxu0 %v698
    %v1008 = vpop.f32.mrb[0].mxu0
    %v1009 = vadd.f32 %v643, %v1008
    %v1010 = vpop.f32.mrb[0].mxu0
    %v1011 = vadd.f32 %v643, %v1010
    %1012 = vmatprep.mubr.f32.mxu0 0.0
    %1013 = vmatmul.mubr.f32.gmra.mrb[0].mxu0 %v701
    %v1014 = vpop.f32.mrb[0].mxu0
    %v1015 = vadd.f32 %v648, %v1014
    %v1016 = vpop.f32.mrb[0].mxu0
    %v1017 = vadd.f32 %v648, %v1016
    %1018 = vmatprep.mubr.f32.mxu0 0.0
    %1019 = vmatmul.mubr.f32.gmra.mrb[0].mxu0 %v704
    %v1020 = vpop.f32.mrb[0].mxu0
    %v1021 = vadd.f32 %v653, %v1020
    %v1022 = vpop.f32.mrb[0].mxu0
    %v1023 = vadd.f32 %v653, %v1022
    %1024 = vmatprep.mubr.f32.mxu0 0.0
    %1025 = vmatmul.mubr.f32.gmra.mrb[0].mxu0 %v707
    %v1026 = vpop.f32.mrb[0].mxu0
    %v1027 = vadd.f32 %v658, %v1026
    %v1028 = vpop.f32.mrb[0].mxu0
    %v1029 = vadd.f32 %v658, %v1028
    %1030 = vdwg.mxu0
    %1031 = vmatprep.subr.mxu0 0.0
    %1032 = vmatpush1.msra.mxu0 %v512
    %1033 = vmatprep.subr.mxu0 0.0
    %1034 = vmatpush1.msra.mxu0 %v517
    %1035 = vmatprep.subr.mxu0 0.0
    %1036 = vmatpush1.msra.mxu0 %v522
    %1037 = vmatprep.subr.mxu0 0.0
    %1038 = vmatpush1.msra.mxu0 %v527
    %1039 = vmatprep.subr.mxu0 0.0
    %1040 = vmatpush1.msra.mxu0 %v532
    %1041 = vmatprep.subr.mxu0 0.0
    %1042 = vmatpush1.msra.mxu0 %v537
    %1043 = vmatprep.subr.mxu0 0.0
    %1044 = vmatpush1.msra.mxu0 %v542
    %1045 = vmatprep.subr.mxu0 0.0
    %1046 = vmatpush1.msra.mxu0 %v547
    %1047 = vmatprep.subr.mxu0 0.0
    %1048 = vmatpush1.msra.mxu0 0.0
    %1049 = vmatprep.subr.mxu0 0.0
    %1050 = vmatpush1.msra.mxu0 0.0
    %1051 = vmatprep.subr.mxu0 0.0
    %1052 = vmatpush1.msra.mxu0 0.0
    %1053 = vmatprep.subr.mxu0 0.0
    %1054 = vmatpush1.msra.mxu0 0.0
    %1055 = vmatprep.subr.mxu0 0.0
    %1056 = vmatpush1.msra.mxu0 0.0
    %1057 = vmatprep.subr.mxu0 0.0
    %1058 = vmatpush1.msra.mxu0 0.0
    %1059 = vmatprep.subr.mxu0 0.0
    %1060 = vmatpush1.msra.mxu0 0.0
    %1061 = vmatprep.subr.mxu0 0.0
    %1062 = vmatpush1.msra.mxu0 0.0
    %1063 = vmatprep.subr.mxu0 0.0
    %1064 = vmatpush1.msra.mxu0 0.0
    %1065 = vmatprep.subr.mxu0 0.0
    %1066 = vmatpush1.msra.mxu0 0.0
    %1067 = vmatprep.subr.mxu0 0.0
    %1068 = vmatpush1.msra.mxu0 0.0
    %1069 = vmatprep.subr.mxu0 0.0
    %1070 = vmatpush1.msra.mxu0 0.0
    %1071 = vmatprep.subr.mxu0 0.0
    %1072 = vmatpush1.msra.mxu0 0.0
    %1073 = vmatprep.subr.mxu0 0.0
    %1074 = vmatpush1.msra.mxu0 0.0
    %1075 = vmatprep.subr.mxu0 0.0
    %1076 = vmatpush1.msra.mxu0 0.0
    %1077 = vmatprep.subr.mxu0 0.0
    %1078 = vmatpush1.msra.mxu0 0.0
    %1079 = vmatprep.subr.mxu0 0.0
    %1080 = vmatpush1.msra.mxu0 0.0
    %1081 = vmatprep.subr.mxu0 0.0
    %1082 = vmatpush1.msra.mxu0 0.0
    %1083 = vmatprep.subr.mxu0 0.0
    %1084 = vmatpush1.msra.mxu0 0.0
    %1085 = vmatprep.subr.mxu0 0.0
    %1086 = vmatpush1.msra.mxu0 0.0
    %1087 = vmatprep.subr.mxu0 0.0
    %1088 = vmatpush1.msra.mxu0 0.0
    %1089 = vmatprep.subr.mxu0 0.0
    %1090 = vmatpush1.msra.mxu0 0.0
    %1091 = vmatprep.subr.mxu0 0.0
    %1092 = vmatpush1.msra.mxu0 0.0
    %1093 = vmatprep.subr.mxu0 0.0
    %1094 = vmatpush1.msra.mxu0 0.0
    %1095 = vmatprep.mubr.f32.mxu0 0.0
    %1096 = vmatmul.mubr.f32.gmra.mrb[0].mxu0 %v662
    %v1097 = vpop.f32.mrb[0].mxu0
    %v1098 = vadd.f32 %v583, %v1097
    %v1099 = vpop.f32.mrb[0].mxu0
    %1100 = vmatprep.mubr.f32.mxu0 0.0
    %1101 = vmatmul.mubr.f32.gmra.mrb[0].mxu0 %v665
    %v1102 = vpop.f32.mrb[0].mxu0
    %v1103 = vadd.f32 %v588, %v1102
    %v1104 = vpop.f32.mrb[0].mxu0
    %1105 = vmatprep.mubr.f32.mxu0 0.0
    %1106 = vmatmul.mubr.f32.gmra.mrb[0].mxu0 %v668
    %v1107 = vpop.f32.mrb[0].mxu0
    %v1108 = vadd.f32 %v593, %v1107
    %v1109 = vpop.f32.mrb[0].mxu0
    %1110 = vmatprep.mubr.f32.mxu0 0.0
    %1111 = vmatmul.mubr.f32.gmra.mrb[0].mxu0 %v671
    %v1112 = vpop.f32.mrb[0].mxu0
    %v1113 = vadd.f32 %v598, %v1112
    %v1114 = vpop.f32.mrb[0].mxu0
    %1115 = vmatprep.mubr.f32.mxu0 0.0
    %1116 = vmatmul.mubr.f32.gmra.mrb[0].mxu0 %v674
    %v1117 = vpop.f32.mrb[0].mxu0
    %v1118 = vadd.f32 %v603, %v1117
    %v1119 = vpop.f32.mrb[0].mxu0
    %1120 = vmatprep.mubr.f32.mxu0 0.0
    %1121 = vmatmul.mubr.f32.gmra.mrb[0].mxu0 %v677
    %v1122 = vpop.f32.mrb[0].mxu0
    %v1123 = vadd.f32 %v608, %v1122
    %v1124 = vpop.f32.mrb[0].mxu0
    %1125 = vmatprep.mubr.f32.mxu0 0.0
    %1126 = vmatmul.mubr.f32.gmra.mrb[0].mxu0 %v680
    %v1127 = vpop.f32.mrb[0].mxu0
    %v1128 = vadd.f32 %v613, %v1127
    %v1129 = vpop.f32.mrb[0].mxu0
    %1130 = vmatprep.mubr.f32.mxu0 0.0
    %1131 = vmatmul.mubr.f32.gmra.mrb[0].mxu0 %v683
    %v1132 = vpop.f32.mrb[0].mxu0
    %v1133 = vadd.f32 %v618, %v1132
    %v1134 = vpop.f32.mrb[0].mxu0
    %1135 = vmatprep.mubr.f32.mxu0 0.0
    %1136 = vmatmul.mubr.f32.gmra.mrb[0].mxu0 %v686
    %v1137 = vpop.f32.mrb[0].mxu0
    %v1138 = vadd.f32 %v623, %v1137
    %v1139 = vpop.f32.mrb[0].mxu0
    %1140 = vmatprep.mubr.f32.mxu0 0.0
    %1141 = vmatmul.mubr.f32.gmra.mrb[0].mxu0 %v689
    %v1142 = vpop.f32.mrb[0].mxu0
    %v1143 = vadd.f32 %v628, %v1142
    %v1144 = vpop.f32.mrb[0].mxu0
    %1145 = vmatprep.mubr.f32.mxu0 0.0
    %1146 = vmatmul.mubr.f32.gmra.mrb[0].mxu0 %v692
    %v1147 = vpop.f32.mrb[0].mxu0
    %v1148 = vadd.f32 %v633, %v1147
    %v1149 = vpop.f32.mrb[0].mxu0
    %1150 = vmatprep.mubr.f32.mxu0 0.0
    %1151 = vmatmul.mubr.f32.gmra.mrb[0].mxu0 %v695
    %v1152 = vpop.f32.mrb[0].mxu0
    %v1153 = vadd.f32 %v638, %v1152
    %v1154 = vpop.f32.mrb[0].mxu0
    %1155 = vmatprep.mubr.f32.mxu0 0.0
    %1156 = vmatmul.mubr.f32.gmra.mrb[0].mxu0 %v698
    %v1157 = vpop.f32.mrb[0].mxu0
    %v1158 = vadd.f32 %v643, %v1157
    %v1159 = vpop.f32.mrb[0].mxu0
    %1160 = vmatprep.mubr.f32.mxu0 0.0
    %1161 = vmatmul.mubr.f32.gmra.mrb[0].mxu0 %v701
    %v1162 = vpop.f32.mrb[0].mxu0
    %v1163 = vadd.f32 %v648, %v1162
    %v1164 = vpop.f32.mrb[0].mxu0
    %1165 = vmatprep.mubr.f32.mxu0 0.0
    %1166 = vmatmul.mubr.f32.gmra.mrb[0].mxu0 %v704
    %v1167 = vpop.f32.mrb[0].mxu0
    %v1168 = vadd.f32 %v653, %v1167
    %v1169 = vpop.f32.mrb[0].mxu0
    %1170 = vmatprep.mubr.f32.mxu0 0.0
    %1171 = vmatmul.mubr.f32.gmra.mrb[0].mxu0 %v707
    %v1172 = vpop.f32.mrb[0].mxu0
    %v1173 = vadd.f32 %v658, %v1172
    %v1174 = vpop.f32.mrb[0].mxu0
    %1175 = vdwg.mxu0
    %v1176 = vmax.f32 %v776, 0.0
    %v1177 = vmax.f32 %v778, 0.0
    %v1178 = vmax.f32 %v937, 0.0
    %v1179 = vmax.f32 %v939, 0.0
    %v1180 = vmax.f32 %v1098, 0.0
    %v1181 = vmax.f32 %v782, 0.0
    %v1182 = vmax.f32 %v784, 0.0
    %v1183 = vmax.f32 %v943, 0.0
    %v1184 = vmax.f32 %v945, 0.0
    %v1185 = vmax.f32 %v1103, 0.0
    %v1186 = vmax.f32 %v788, 0.0
    %v1187 = vmax.f32 %v790, 0.0
    %v1188 = vmax.f32 %v949, 0.0
    %v1189 = vmax.f32 %v951, 0.0
    %v1190 = vmax.f32 %v1108, 0.0
    %v1191 = vmax.f32 %v794, 0.0
    %v1192 = vmax.f32 %v796, 0.0
    %v1193 = vmax.f32 %v955, 0.0
    %v1194 = vmax.f32 %v957, 0.0
    %v1195 = vmax.f32 %v1113, 0.0
    %v1196 = vmax.f32 %v800, 0.0
    %v1197 = vmax.f32 %v802, 0.0
    %v1198 = vmax.f32 %v961, 0.0
    %v1199 = vmax.f32 %v963, 0.0
    %v1200 = vmax.f32 %v1118, 0.0
    %v1201 = vmax.f32 %v806, 0.0
    %v1202 = vmax.f32 %v808, 0.0
    %v1203 = vmax.f32 %v967, 0.0
    %v1204 = vmax.f32 %v969, 0.0
    %v1205 = vmax.f32 %v1123, 0.0
    %v1206 = vmax.f32 %v812, 0.0
    %v1207 = vmax.f32 %v814, 0.0
    %v1208 = vmax.f32 %v973, 0.0
    %v1209 = vmax.f32 %v975, 0.0
    %v1210 = vmax.f32 %v1128, 0.0
    %v1211 = vmax.f32 %v818, 0.0
    %v1212 = vmax.f32 %v820, 0.0
    %v1213 = vmax.f32 %v979, 0.0
    %v1214 = vmax.f32 %v981, 0.0
    %v1215 = vmax.f32 %v1133, 0.0
    %v1216 = vmax.f32 %v824, 0.0
    %v1217 = vmax.f32 %v826, 0.0
    %v1218 = vmax.f32 %v985, 0.0
    %v1219 = vmax.f32 %v987, 0.0
    %v1220 = vmax.f32 %v1138, 0.0
    %v1221 = vmax.f32 %v830, 0.0
    %v1222 = vmax.f32 %v832, 0.0
    %v1223 = vmax.f32 %v991, 0.0
    %v1224 = vmax.f32 %v993, 0.0
    %v1225 = vmax.f32 %v1143, 0.0
    %v1226 = vmax.f32 %v836, 0.0
    %v1227 = vmax.f32 %v838, 0.0
    %v1228 = vmax.f32 %v997, 0.0
    %v1229 = vmax.f32 %v999, 0.0
    %v1230 = vmax.f32 %v1148, 0.0
    %v1231 = vmax.f32 %v842, 0.0
    %v1232 = vmax.f32 %v844, 0.0
    %v1233 = vmax.f32 %v1003, 0.0
    %v1234 = vmax.f32 %v1005, 0.0
    %v1235 = vmax.f32 %v1153, 0.0
    %v1236 = vmax.f32 %v848, 0.0
    %v1237 = vmax.f32 %v850, 0.0
    %v1238 = vmax.f32 %v1009, 0.0
    %v1239 = vmax.f32 %v1011, 0.0
    %v1240 = vmax.f32 %v1158, 0.0
    %v1241 = vmax.f32 %v854, 0.0
    %v1242 = vmax.f32 %v856, 0.0
    %v1243 = vmax.f32 %v1015, 0.0
    %v1244 = vmax.f32 %v1017, 0.0
    %v1245 = vmax.f32 %v1163, 0.0
    %v1246 = vmax.f32 %v860, 0.0
    %v1247 = vmax.f32 %v862, 0.0
    %v1248 = vmax.f32 %v1021, 0.0
    %v1249 = vmax.f32 %v1023, 0.0
    %v1250 = vmax.f32 %v1168, 0.0
    %v1251 = vmax.f32 %v866, 0.0
    %v1252 = vmax.f32 %v868, 0.0
    %v1253 = vmax.f32 %v1027, 0.0
    %v1254 = vmax.f32 %v1029, 0.0
    %v1255 = vmax.f32 %v1173, 0.0
    %v1256 = vlaneseq
    %v1257 = vshrl.u32 %v1256, 7
    %v1258 = vsub.s32 0, %v1257
    %v1259 = vrot.slane %v91, %v1258
    %v1260 = vlaneseq
    %v1261 = vshrl.u32 %v1260, 7
    %v1262 = vsub.s32 0, %v1261
    %v1263 = vrot.slane %v92, %v1262
    %v1264 = vlaneseq
    %v1265 = vshrl.u32 %v1264, 7
    %v1266 = vsub.s32 0, %v1265
    %v1267 = vrot.slane %v93, %v1266
    %v1268 = vlaneseq
    %v1269 = vshrl.u32 %v1268, 7
    %v1270 = vsub.s32 0, %v1269
    %v1271 = vrot.slane %v94, %v1270
    %v1272 = vlaneseq
    %v1273 = vshrl.u32 %v1272, 7
    %v1274 = vsub.s32 0, %v1273
    %v1275 = vrot.slane %v95, %v1274
    %v1276 = vmul.f32 %v1176, %v1259
    %v1277 = vmul.f32 %v1177, %v1263
    %v1278 = vmul.f32 %v1178, %v1267
    %v1279 = vmul.f32 %v1179, %v1271
    %v1280 = vmul.f32 %v1180, %v1275
    %v1281 = vmul.f32 %v1181, %v1259
    %v1282 = vmul.f32 %v1182, %v1263
    %v1283 = vmul.f32 %v1183, %v1267
    %v1284 = vmul.f32 %v1184, %v1271
    %v1285 = vmul.f32 %v1185, %v1275
    %v1286 = vmul.f32 %v1186, %v1259
    %v1287 = vmul.f32 %v1187, %v1263
    %v1288 = vmul.f32 %v1188, %v1267
    %v1289 = vmul.f32 %v1189, %v1271
    %v1290 = vmul.f32 %v1190, %v1275
    %v1291 = vmul.f32 %v1191, %v1259
    %v1292 = vmul.f32 %v1192, %v1263
    %v1293 = vmul.f32 %v1193, %v1267
    %v1294 = vmul.f32 %v1194, %v1271
    %v1295 = vmul.f32 %v1195, %v1275
    %v1296 = vmul.f32 %v1196, %v1259
    %v1297 = vmul.f32 %v1197, %v1263
    %v1298 = vmul.f32 %v1198, %v1267
    %v1299 = vmul.f32 %v1199, %v1271
    %v1300 = vmul.f32 %v1200, %v1275
    %v1301 = vmul.f32 %v1201, %v1259
    %v1302 = vmul.f32 %v1202, %v1263
    %v1303 = vmul.f32 %v1203, %v1267
    %v1304 = vmul.f32 %v1204, %v1271
    %v1305 = vmul.f32 %v1205, %v1275
    %v1306 = vmul.f32 %v1206, %v1259
    %v1307 = vmul.f32 %v1207, %v1263
    %v1308 = vmul.f32 %v1208, %v1267
    %v1309 = vmul.f32 %v1209, %v1271
    %v1310 = vmul.f32 %v1210, %v1275
    %v1311 = vmul.f32 %v1211, %v1259
    %v1312 = vmul.f32 %v1212, %v1263
    %v1313 = vmul.f32 %v1213, %v1267
    %v1314 = vmul.f32 %v1214, %v1271
    %v1315 = vmul.f32 %v1215, %v1275
    %v1316 = vmul.f32 %v1216, %v1259
    %v1317 = vmul.f32 %v1217, %v1263
    %v1318 = vmul.f32 %v1218, %v1267
    %v1319 = vmul.f32 %v1219, %v1271
    %v1320 = vmul.f32 %v1220, %v1275
    %v1321 = vmul.f32 %v1221, %v1259
    %v1322 = vmul.f32 %v1222, %v1263
    %v1323 = vmul.f32 %v1223, %v1267
    %v1324 = vmul.f32 %v1224, %v1271
    %v1325 = vmul.f32 %v1225, %v1275
    %v1326 = vmul.f32 %v1226, %v1259
    %v1327 = vmul.f32 %v1227, %v1263
    %v1328 = vmul.f32 %v1228, %v1267
    %v1329 = vmul.f32 %v1229, %v1271
    %v1330 = vmul.f32 %v1230, %v1275
    %v1331 = vmul.f32 %v1231, %v1259
    %v1332 = vmul.f32 %v1232, %v1263
    %v1333 = vmul.f32 %v1233, %v1267
    %v1334 = vmul.f32 %v1234, %v1271
    %v1335 = vmul.f32 %v1235, %v1275
    %v1336 = vmul.f32 %v1236, %v1259
    %v1337 = vmul.f32 %v1237, %v1263
    %v1338 = vmul.f32 %v1238, %v1267
    %v1339 = vmul.f32 %v1239, %v1271
    %v1340 = vmul.f32 %v1240, %v1275
    %v1341 = vmul.f32 %v1241, %v1259
    %v1342 = vmul.f32 %v1242, %v1263
    %v1343 = vmul.f32 %v1243, %v1267
    %v1344 = vmul.f32 %v1244, %v1271
    %v1345 = vmul.f32 %v1245, %v1275
    %v1346 = vmul.f32 %v1246, %v1259
    %v1347 = vmul.f32 %v1247, %v1263
    %v1348 = vmul.f32 %v1248, %v1267
    %v1349 = vmul.f32 %v1249, %v1271
    %v1350 = vmul.f32 %v1250, %v1275
    %v1351 = vmul.f32 %v1251, %v1259
    %v1352 = vmul.f32 %v1252, %v1263
    %v1353 = vmul.f32 %v1253, %v1267
    %v1354 = vmul.f32 %v1254, %v1271
    %v1355 = vmul.f32 %v1255, %v1275
    %v1356 = vmax.f32 %v1276, %v1277
    %v1357 = vmax.f32 %v1281, %v1282
    %v1358 = vmax.f32 %v1286, %v1287
    %v1359 = vmax.f32 %v1291, %v1292
    %v1360 = vmax.f32 %v1296, %v1297
    %v1361 = vmax.f32 %v1301, %v1302
    %v1362 = vmax.f32 %v1306, %v1307
    %v1363 = vmax.f32 %v1311, %v1312
    %v1364 = vmax.f32 %v1316, %v1317
    %v1365 = vmax.f32 %v1321, %v1322
    %v1366 = vmax.f32 %v1326, %v1327
    %v1367 = vmax.f32 %v1331, %v1332
    %v1368 = vmax.f32 %v1336, %v1337
    %v1369 = vmax.f32 %v1341, %v1342
    %v1370 = vmax.f32 %v1346, %v1347
    %v1371 = vmax.f32 %v1351, %v1352
    %v1372 = vmax.f32 %v1356, %v1278
    %v1373 = vmax.f32 %v1357, %v1283
    %v1374 = vmax.f32 %v1358, %v1288
    %v1375 = vmax.f32 %v1359, %v1293
    %v1376 = vmax.f32 %v1360, %v1298
    %v1377 = vmax.f32 %v1361, %v1303
    %v1378 = vmax.f32 %v1362, %v1308
    %v1379 = vmax.f32 %v1363, %v1313
    %v1380 = vmax.f32 %v1364, %v1318
    %v1381 = vmax.f32 %v1365, %v1323
    %v1382 = vmax.f32 %v1366, %v1328
    %v1383 = vmax.f32 %v1367, %v1333
    %v1384 = vmax.f32 %v1368, %v1338
    %v1385 = vmax.f32 %v1369, %v1343
    %v1386 = vmax.f32 %v1370, %v1348
    %v1387 = vmax.f32 %v1371, %v1353
    %v1388 = vmax.f32 %v1372, %v1279
    %v1389 = vmax.f32 %v1373, %v1284
    %v1390 = vmax.f32 %v1374, %v1289
    %v1391 = vmax.f32 %v1375, %v1294
    %v1392 = vmax.f32 %v1376, %v1299
    %v1393 = vmax.f32 %v1377, %v1304
    %v1394 = vmax.f32 %v1378, %v1309
    %v1395 = vmax.f32 %v1379, %v1314
    %v1396 = vmax.f32 %v1380, %v1319
    %v1397 = vmax.f32 %v1381, %v1324
    %v1398 = vmax.f32 %v1382, %v1329
    %v1399 = vmax.f32 %v1383, %v1334
    %v1400 = vmax.f32 %v1384, %v1339
    %v1401 = vmax.f32 %v1385, %v1344
    %v1402 = vmax.f32 %v1386, %v1349
    %v1403 = vmax.f32 %v1387, %v1354
    %v1404 = vmax.f32 %v1388, %v1280
    %v1405 = vmax.f32 %v1389, %v1285
    %v1406 = vmax.f32 %v1390, %v1290
    %v1407 = vmax.f32 %v1391, %v1295
    %v1408 = vmax.f32 %v1392, %v1300
    %v1409 = vmax.f32 %v1393, %v1305
    %v1410 = vmax.f32 %v1394, %v1310
    %v1411 = vmax.f32 %v1395, %v1315
    %v1412 = vmax.f32 %v1396, %v1320
    %v1413 = vmax.f32 %v1397, %v1325
    %v1414 = vmax.f32 %v1398, %v1330
    %v1415 = vmax.f32 %v1399, %v1335
    %v1416 = vmax.f32 %v1400, %v1340
    %v1417 = vmax.f32 %v1401, %v1345
    %v1418 = vmax.f32 %v1402, %v1350
    %v1419 = vmax.f32 %v1403, %v1355
    %v1420 = vld [vmem:[%s1] sm:$0xff]
    %v1421 = vld [vmem:[%s6] sm:$0xff]
    %v1422 = vld [vmem:[%s6 + $0x8] sm:$0xff]
    %v1423 = vld [vmem:[%s6 + $0x10] sm:$0xff]
    %v1424 = vld [vmem:[%s6 + $0x18] sm:$0xff]
    %v1425 = vld [vmem:[%s6 + $0x20] sm:$0xff]
    %v1426 = vld [vmem:[%s6 + $0x28] sm:$0xff]
    %v1427 = vld [vmem:[%s6 + $0x30] sm:$0xff]
    %v1428 = vld [vmem:[%s6 + $0x38] sm:$0xff]
    %v1429 = vld [vmem:[%s8] sm:$0xff]
    %v1430 = vld [vmem:[%s8 + $0x8] sm:$0xff]
    %v1431 = vld [vmem:[%s8 + $0x10] sm:$0xff]
    %v1432 = vld [vmem:[%s8 + $0x18] sm:$0xff]
    %v1433 = vld [vmem:[%s8 + $0x20] sm:$0xff]
    %v1434 = vld [vmem:[%s8 + $0x28] sm:$0xff]
    %v1435 = vld [vmem:[%s8 + $0x30] sm:$0xff]
    %v1436 = vld [vmem:[%s8 + $0x38] sm:$0xff]
    %1438 = vset.pattern.permute.xlu0 0
    %1439 = vperm.xlu0 %1438, %v1429
    %v1440 = vpop.permute.xlu0 %1439
    %1443 = vset.pattern.permute.xlu0 0
    %1444 = vperm.xlu0 %1443, %v1430
    %v1445 = vpop.permute.xlu0 %1444
    %1448 = vset.pattern.permute.xlu0 0
    %1449 = vperm.xlu0 %1448, %v1431
    %v1450 = vpop.permute.xlu0 %1449
    %1453 = vset.pattern.permute.xlu0 0
    %1454 = vperm.xlu0 %1453, %v1432
    %v1455 = vpop.permute.xlu0 %1454
    %1458 = vset.pattern.permute.xlu0 0
    %1459 = vperm.xlu0 %1458, %v1433
    %v1460 = vpop.permute.xlu0 %1459
    %1463 = vset.pattern.permute.xlu0 0
    %1464 = vperm.xlu0 %1463, %v1434
    %v1465 = vpop.permute.xlu0 %1464
    %1468 = vset.pattern.permute.xlu0 0
    %1469 = vperm.xlu0 %1468, %v1435
    %v1470 = vpop.permute.xlu0 %1469
    %1473 = vset.pattern.permute.xlu0 0
    %1474 = vperm.xlu0 %1473, %v1436
    %v1475 = vpop.permute.xlu0 %1474
    %1477 = vmatprep.subr.mxu0 0.0
    %1478 = vmatpush1.msra.mxu0 %v1404
    %1479 = vmatprep.subr.mxu0 0.0
    %1480 = vmatpush1.msra.mxu0 %v1405
    %1481 = vmatprep.subr.mxu0 0.0
    %1482 = vmatpush1.msra.mxu0 %v1406
    %1483 = vmatprep.subr.mxu0 0.0
    %1484 = vmatpush1.msra.mxu0 %v1407
    %1485 = vmatprep.subr.mxu0 0.0
    %1486 = vmatpush1.msra.mxu0 %v1408
    %1487 = vmatprep.subr.mxu0 0.0
    %1488 = vmatpush1.msra.mxu0 %v1409
    %1489 = vmatprep.subr.mxu0 0.0
    %1490 = vmatpush1.msra.mxu0 %v1410
    %1491 = vmatprep.subr.mxu0 0.0
    %1492 = vmatpush1.msra.mxu0 %v1411
    %1493 = vmatprep.subr.mxu0 0.0
    %1494 = vmatpush1.msra.mxu0 %v1412
    %1495 = vmatprep.subr.mxu0 0.0
    %1496 = vmatpush1.msra.mxu0 %v1413
    %1497 = vmatprep.subr.mxu0 0.0
    %1498 = vmatpush1.msra.mxu0 %v1414
    %1499 = vmatprep.subr.mxu0 0.0
    %1500 = vmatpush1.msra.mxu0 %v1415
    %1501 = vmatprep.subr.mxu0 0.0
    %1502 = vmatpush1.msra.mxu0 %v1416
    %1503 = vmatprep.subr.mxu0 0.0
    %1504 = vmatpush1.msra.mxu0 %v1417
    %1505 = vmatprep.subr.mxu0 0.0
    %1506 = vmatpush1.msra.mxu0 %v1418
    %1507 = vmatprep.subr.mxu0 0.0
    %1508 = vmatpush1.msra.mxu0 %v1419
    %1509 = vmatprep.subr.mxu0 0.0
    %1510 = vmatpush1.msra.mxu0 0.0
    %1511 = vmatprep.subr.mxu0 0.0
    %1512 = vmatpush1.msra.mxu0 0.0
    %1513 = vmatprep.subr.mxu0 0.0
    %1514 = vmatpush1.msra.mxu0 0.0
    %1515 = vmatprep.subr.mxu0 0.0
    %1516 = vmatpush1.msra.mxu0 0.0
    %1517 = vmatprep.subr.mxu0 0.0
    %1518 = vmatpush1.msra.mxu0 0.0
    %1519 = vmatprep.subr.mxu0 0.0
    %1520 = vmatpush1.msra.mxu0 0.0
    %1521 = vmatprep.subr.mxu0 0.0
    %1522 = vmatpush1.msra.mxu0 0.0
    %1523 = vmatprep.subr.mxu0 0.0
    %1524 = vmatpush1.msra.mxu0 0.0
    %1525 = vmatprep.subr.mxu0 0.0
    %1526 = vmatpush1.msra.mxu0 0.0
    %1527 = vmatprep.subr.mxu0 0.0
    %1528 = vmatpush1.msra.mxu0 0.0
    %1529 = vmatprep.subr.mxu0 0.0
    %1530 = vmatpush1.msra.mxu0 0.0
    %1531 = vmatprep.subr.mxu0 0.0
    %1532 = vmatpush1.msra.mxu0 0.0
    %1533 = vmatprep.subr.mxu0 0.0
    %1534 = vmatpush1.msra.mxu0 0.0
    %1535 = vmatprep.subr.mxu0 0.0
    %1536 = vmatpush1.msra.mxu0 0.0
    %1537 = vmatprep.subr.mxu0 0.0
    %1538 = vmatpush1.msra.mxu0 0.0
    %1539 = vmatprep.subr.mxu0 0.0
    %1540 = vmatpush1.msra.mxu0 0.0
    %1541 = vmatprep.mubr.f32.mxu0 0.0
    %1542 = vmatmul.mubr.f32.gmra.mrb[0].mxu0 %v1421
    %v1543 = vpop.f32.mrb[0].mxu0
    %v1544 = vadd.f32 %v1440, %v1543
    %v1545 = vpop.f32.mrb[0].mxu0
    %1546 = vmatprep.mubr.f32.mxu0 0.0
    %1547 = vmatmul.mubr.f32.gmra.mrb[0].mxu0 %v1422
    %v1548 = vpop.f32.mrb[0].mxu0
    %v1549 = vadd.f32 %v1445, %v1548
    %v1550 = vpop.f32.mrb[0].mxu0
    %1551 = vmatprep.mubr.f32.mxu0 0.0
    %1552 = vmatmul.mubr.f32.gmra.mrb[0].mxu0 %v1423
    %v1553 = vpop.f32.mrb[0].mxu0
    %v1554 = vadd.f32 %v1450, %v1553
    %v1555 = vpop.f32.mrb[0].mxu0
    %1556 = vmatprep.mubr.f32.mxu0 0.0
    %1557 = vmatmul.mubr.f32.gmra.mrb[0].mxu0 %v1424
    %v1558 = vpop.f32.mrb[0].mxu0
    %v1559 = vadd.f32 %v1455, %v1558
    %v1560 = vpop.f32.mrb[0].mxu0
    %1561 = vmatprep.mubr.f32.mxu0 0.0
    %1562 = vmatmul.mubr.f32.gmra.mrb[0].mxu0 %v1425
    %v1563 = vpop.f32.mrb[0].mxu0
    %v1564 = vadd.f32 %v1460, %v1563
    %v1565 = vpop.f32.mrb[0].mxu0
    %1566 = vmatprep.mubr.f32.mxu0 0.0
    %1567 = vmatmul.mubr.f32.gmra.mrb[0].mxu0 %v1426
    %v1568 = vpop.f32.mrb[0].mxu0
    %v1569 = vadd.f32 %v1465, %v1568
    %v1570 = vpop.f32.mrb[0].mxu0
    %1571 = vmatprep.mubr.f32.mxu0 0.0
    %1572 = vmatmul.mubr.f32.gmra.mrb[0].mxu0 %v1427
    %v1573 = vpop.f32.mrb[0].mxu0
    %v1574 = vadd.f32 %v1470, %v1573
    %v1575 = vpop.f32.mrb[0].mxu0
    %1576 = vmatprep.mubr.f32.mxu0 0.0
    %1577 = vmatmul.mubr.f32.gmra.mrb[0].mxu0 %v1428
    %v1578 = vpop.f32.mrb[0].mxu0
    %v1579 = vadd.f32 %v1475, %v1578
    %v1580 = vpop.f32.mrb[0].mxu0
    %1581 = vdwg.mxu0
    %v1582 = vld [vmem:[%s7] sm:$0xff]
    %v1583 = vld [vmem:[%s7 + $0x8] sm:$0xff]
    %v1584 = vld [vmem:[%s7 + $0x10] sm:$0xff]
    %v1585 = vld [vmem:[%s7 + $0x18] sm:$0xff]
    %v1586 = vld [vmem:[%s7 + $0x20] sm:$0xff]
    %v1587 = vld [vmem:[%s7 + $0x28] sm:$0xff]
    %v1588 = vld [vmem:[%s7 + $0x30] sm:$0xff]
    %v1589 = vld [vmem:[%s7 + $0x38] sm:$0xff]
    %1591 = vset.pattern.permute.xlu0 0
    %1592 = vperm.xlu0 %1591, %v1582
    %v1593 = vpop.permute.xlu0 %1592
    %1596 = vset.pattern.permute.xlu0 0
    %1597 = vperm.xlu0 %1596, %v1583
    %v1598 = vpop.permute.xlu0 %1597
    %1601 = vset.pattern.permute.xlu0 0
    %1602 = vperm.xlu0 %1601, %v1584
    %v1603 = vpop.permute.xlu0 %1602
    %1606 = vset.pattern.permute.xlu0 0
    %1607 = vperm.xlu0 %1606, %v1585
    %v1608 = vpop.permute.xlu0 %1607
    %1611 = vset.pattern.permute.xlu0 0
    %1612 = vperm.xlu0 %1611, %v1586
    %v1613 = vpop.permute.xlu0 %1612
    %1616 = vset.pattern.permute.xlu0 0
    %1617 = vperm.xlu0 %1616, %v1587
    %v1618 = vpop.permute.xlu0 %1617
    %1621 = vset.pattern.permute.xlu0 0
    %1622 = vperm.xlu0 %1621, %v1588
    %v1623 = vpop.permute.xlu0 %1622
    %1626 = vset.pattern.permute.xlu0 0
    %1627 = vperm.xlu0 %1626, %v1589
    %v1628 = vpop.permute.xlu0 %1627
    %v1630 = vlaneseq
    %v1631 = vshrl.u32 %v1630, 7
    %v1632 = vsub.s32 0, %v1631
    %v1633 = vrot.slane %v1420, %v1632
    %v1634 = vmul.f32 %v1593, %v1633
    %v1635 = vmul.f32 %v1598, %v1633
    %v1636 = vmul.f32 %v1603, %v1633
    %v1637 = vmul.f32 %v1608, %v1633
    %v1638 = vmul.f32 %v1613, %v1633
    %v1639 = vmul.f32 %v1618, %v1633
    %v1640 = vmul.f32 %v1623, %v1633
    %v1641 = vmul.f32 %v1628, %v1633
    %v1642 = vadd.f32 %v1544, %v1634
    %v1643 = vadd.f32 %v1549, %v1635
    %v1644 = vadd.f32 %v1554, %v1636
    %v1645 = vadd.f32 %v1559, %v1637
    %v1646 = vadd.f32 %v1564, %v1638
    %v1647 = vadd.f32 %v1569, %v1639
    %v1648 = vadd.f32 %v1574, %v1640
    %v1649 = vadd.f32 %v1579, %v1641
    %1650 = vset.pattern.permute.xlu0 1
    %1651 = vperm.xlu0 %1650, %v1582
    %v1652 = vpop.permute.xlu0 %1651
    %1654 = vset.pattern.permute.xlu0 1
    %1655 = vperm.xlu0 %1654, %v1583
    %v1656 = vpop.permute.xlu0 %1655
    %1658 = vset.pattern.permute.xlu0 1
    %1659 = vperm.xlu0 %1658, %v1584
    %v1660 = vpop.permute.xlu0 %1659
    %1662 = vset.pattern.permute.xlu0 1
    %1663 = vperm.xlu0 %1662, %v1585
    %v1664 = vpop.permute.xlu0 %1663
    %1666 = vset.pattern.permute.xlu0 1
    %1667 = vperm.xlu0 %1666, %v1586
    %v1668 = vpop.permute.xlu0 %1667
    %1670 = vset.pattern.permute.xlu0 1
    %1671 = vperm.xlu0 %1670, %v1587
    %v1672 = vpop.permute.xlu0 %1671
    %1674 = vset.pattern.permute.xlu0 1
    %1675 = vperm.xlu0 %1674, %v1588
    %v1676 = vpop.permute.xlu0 %1675
    %1678 = vset.pattern.permute.xlu0 1
    %1679 = vperm.xlu0 %1678, %v1589
    %v1680 = vpop.permute.xlu0 %1679
    %v1682 = vlaneseq
    %v1683 = vshrl.u32 %v1682, 7
    %v1684 = vsub.s32 1, %v1683
    %v1685 = vrot.slane %v1420, %v1684
    %v1686 = vmul.f32 %v1652, %v1685
    %v1687 = vmul.f32 %v1656, %v1685
    %v1688 = vmul.f32 %v1660, %v1685
    %v1689 = vmul.f32 %v1664, %v1685
    %v1690 = vmul.f32 %v1668, %v1685
    %v1691 = vmul.f32 %v1672, %v1685
    %v1692 = vmul.f32 %v1676, %v1685
    %v1693 = vmul.f32 %v1680, %v1685
    %v1694 = vadd.f32 %v1642, %v1686
    %v1695 = vadd.f32 %v1643, %v1687
    %v1696 = vadd.f32 %v1644, %v1688
    %v1697 = vadd.f32 %v1645, %v1689
    %v1698 = vadd.f32 %v1646, %v1690
    %v1699 = vadd.f32 %v1647, %v1691
    %v1700 = vadd.f32 %v1648, %v1692
    %v1701 = vadd.f32 %v1649, %v1693
    %1702 = vset.pattern.permute.xlu0 2
    %1703 = vperm.xlu0 %1702, %v1582
    %v1704 = vpop.permute.xlu0 %1703
    %1706 = vset.pattern.permute.xlu0 2
    %1707 = vperm.xlu0 %1706, %v1583
    %v1708 = vpop.permute.xlu0 %1707
    %1710 = vset.pattern.permute.xlu0 2
    %1711 = vperm.xlu0 %1710, %v1584
    %v1712 = vpop.permute.xlu0 %1711
    %1714 = vset.pattern.permute.xlu0 2
    %1715 = vperm.xlu0 %1714, %v1585
    %v1716 = vpop.permute.xlu0 %1715
    %1718 = vset.pattern.permute.xlu0 2
    %1719 = vperm.xlu0 %1718, %v1586
    %v1720 = vpop.permute.xlu0 %1719
    %1722 = vset.pattern.permute.xlu0 2
    %1723 = vperm.xlu0 %1722, %v1587
    %v1724 = vpop.permute.xlu0 %1723
    %1726 = vset.pattern.permute.xlu0 2
    %1727 = vperm.xlu0 %1726, %v1588
    %v1728 = vpop.permute.xlu0 %1727
    %1730 = vset.pattern.permute.xlu0 2
    %1731 = vperm.xlu0 %1730, %v1589
    %v1732 = vpop.permute.xlu0 %1731
    %v1734 = vlaneseq
    %v1735 = vshrl.u32 %v1734, 7
    %v1736 = vsub.s32 2, %v1735
    %v1737 = vrot.slane %v1420, %v1736
    %v1738 = vmul.f32 %v1704, %v1737
    %v1739 = vmul.f32 %v1708, %v1737
    %v1740 = vmul.f32 %v1712, %v1737
    %v1741 = vmul.f32 %v1716, %v1737
    %v1742 = vmul.f32 %v1720, %v1737
    %v1743 = vmul.f32 %v1724, %v1737
    %v1744 = vmul.f32 %v1728, %v1737
    %v1745 = vmul.f32 %v1732, %v1737
    %v1746 = vadd.f32 %v1694, %v1738
    %v1747 = vadd.f32 %v1695, %v1739
    %v1748 = vadd.f32 %v1696, %v1740
    %v1749 = vadd.f32 %v1697, %v1741
    %v1750 = vadd.f32 %v1698, %v1742
    %v1751 = vadd.f32 %v1699, %v1743
    %v1752 = vadd.f32 %v1700, %v1744
    %v1753 = vadd.f32 %v1701, %v1745
    %1754 = vset.pattern.permute.xlu0 3
    %1755 = vperm.xlu0 %1754, %v1582
    %v1756 = vpop.permute.xlu0 %1755
    %1758 = vset.pattern.permute.xlu0 3
    %1759 = vperm.xlu0 %1758, %v1583
    %v1760 = vpop.permute.xlu0 %1759
    %1762 = vset.pattern.permute.xlu0 3
    %1763 = vperm.xlu0 %1762, %v1584
    %v1764 = vpop.permute.xlu0 %1763
    %1766 = vset.pattern.permute.xlu0 3
    %1767 = vperm.xlu0 %1766, %v1585
    %v1768 = vpop.permute.xlu0 %1767
    %1770 = vset.pattern.permute.xlu0 3
    %1771 = vperm.xlu0 %1770, %v1586
    %v1772 = vpop.permute.xlu0 %1771
    %1774 = vset.pattern.permute.xlu0 3
    %1775 = vperm.xlu0 %1774, %v1587
    %v1776 = vpop.permute.xlu0 %1775
    %1778 = vset.pattern.permute.xlu0 3
    %1779 = vperm.xlu0 %1778, %v1588
    %v1780 = vpop.permute.xlu0 %1779
    %1782 = vset.pattern.permute.xlu0 3
    %1783 = vperm.xlu0 %1782, %v1589
    %v1784 = vpop.permute.xlu0 %1783
    %v1786 = vlaneseq
    %v1787 = vshrl.u32 %v1786, 7
    %v1788 = vsub.s32 3, %v1787
    %v1789 = vrot.slane %v1420, %v1788
    %v1790 = vmul.f32 %v1756, %v1789
    %v1791 = vmul.f32 %v1760, %v1789
    %v1792 = vmul.f32 %v1764, %v1789
    %v1793 = vmul.f32 %v1768, %v1789
    %v1794 = vmul.f32 %v1772, %v1789
    %v1795 = vmul.f32 %v1776, %v1789
    %v1796 = vmul.f32 %v1780, %v1789
    %v1797 = vmul.f32 %v1784, %v1789
    %v1798 = vadd.f32 %v1746, %v1790
    %v1799 = vadd.f32 %v1747, %v1791
    %v1800 = vadd.f32 %v1748, %v1792
    %v1801 = vadd.f32 %v1749, %v1793
    %v1802 = vadd.f32 %v1750, %v1794
    %v1803 = vadd.f32 %v1751, %v1795
    %v1804 = vadd.f32 %v1752, %v1796
    %v1805 = vadd.f32 %v1753, %v1797
    %v1806 = vmax.f32 %v1798, 0.0
    %v1807 = vmax.f32 %v1799, 0.0
    %v1808 = vmax.f32 %v1800, 0.0
    %v1809 = vmax.f32 %v1801, 0.0
    %v1810 = vmax.f32 %v1802, 0.0
    %v1811 = vmax.f32 %v1803, 0.0
    %v1812 = vmax.f32 %v1804, 0.0
    %v1813 = vmax.f32 %v1805, 0.0
    %v1814 = vld [vmem:[%s9] sm:$0xff]
    %v1815 = vld [vmem:[%s9 + $0x8] sm:$0xff]
    %v1816 = vld [vmem:[%s9 + $0x10] sm:$0xff]
    %v1817 = vld [vmem:[%s9 + $0x18] sm:$0xff]
    %v1818 = vld [vmem:[%s9 + $0x20] sm:$0xff]
    %v1819 = vld [vmem:[%s9 + $0x28] sm:$0xff]
    %v1820 = vld [vmem:[%s9 + $0x30] sm:$0xff]
    %v1821 = vld [vmem:[%s9 + $0x38] sm:$0xff]
    %v1822 = vld [vmem:[%s9 + $0x40] sm:$0xff]
    %v1823 = vld [vmem:[%s9 + $0x48] sm:$0xff]
    %v1824 = vld [vmem:[%s9 + $0x50] sm:$0xff]
    %v1825 = vld [vmem:[%s9 + $0x58] sm:$0xff]
    %v1826 = vld [vmem:[%s9 + $0x60] sm:$0xff]
    %v1827 = vld [vmem:[%s9 + $0x68] sm:$0xff]
    %v1828 = vld [vmem:[%s9 + $0x70] sm:$0xff]
    %v1829 = vld [vmem:[%s9 + $0x78] sm:$0xff]
    %v1830 = vld [vmem:[%s10] sm:$0xff]
    %v1831 = vld [vmem:[%s10 + $0x8] sm:$0xff]
    %v1832 = vld [vmem:[%s10 + $0x10] sm:$0xff]
    %v1833 = vld [vmem:[%s10 + $0x18] sm:$0xff]
    %v1834 = vld [vmem:[%s10 + $0x20] sm:$0xff]
    %v1835 = vld [vmem:[%s10 + $0x28] sm:$0xff]
    %v1836 = vld [vmem:[%s10 + $0x30] sm:$0xff]
    %v1837 = vld [vmem:[%s10 + $0x38] sm:$0xff]
    %v1838 = vld [vmem:[%s10 + $0x40] sm:$0xff]
    %v1839 = vld [vmem:[%s10 + $0x48] sm:$0xff]
    %v1840 = vld [vmem:[%s10 + $0x50] sm:$0xff]
    %v1841 = vld [vmem:[%s10 + $0x58] sm:$0xff]
    %v1842 = vld [vmem:[%s10 + $0x60] sm:$0xff]
    %v1843 = vld [vmem:[%s10 + $0x68] sm:$0xff]
    %v1844 = vld [vmem:[%s10 + $0x70] sm:$0xff]
    %v1845 = vld [vmem:[%s10 + $0x78] sm:$0xff]
    %1847 = vset.pattern.permute.xlu0 0
    %1848 = vperm.xlu0 %1847, %v1830
    %v1849 = vpop.permute.xlu0 %1848
    %1852 = vset.pattern.permute.xlu0 0
    %1853 = vperm.xlu0 %1852, %v1831
    %v1854 = vpop.permute.xlu0 %1853
    %1857 = vset.pattern.permute.xlu0 0
    %1858 = vperm.xlu0 %1857, %v1832
    %v1859 = vpop.permute.xlu0 %1858
    %1862 = vset.pattern.permute.xlu0 0
    %1863 = vperm.xlu0 %1862, %v1833
    %v1864 = vpop.permute.xlu0 %1863
    %1867 = vset.pattern.permute.xlu0 0
    %1868 = vperm.xlu0 %1867, %v1834
    %v1869 = vpop.permute.xlu0 %1868
    %1872 = vset.pattern.permute.xlu0 0
    %1873 = vperm.xlu0 %1872, %v1835
    %v1874 = vpop.permute.xlu0 %1873
    %1877 = vset.pattern.permute.xlu0 0
    %1878 = vperm.xlu0 %1877, %v1836
    %v1879 = vpop.permute.xlu0 %1878
    %1882 = vset.pattern.permute.xlu0 0
    %1883 = vperm.xlu0 %1882, %v1837
    %v1884 = vpop.permute.xlu0 %1883
    %1887 = vset.pattern.permute.xlu0 0
    %1888 = vperm.xlu0 %1887, %v1838
    %v1889 = vpop.permute.xlu0 %1888
    %1892 = vset.pattern.permute.xlu0 0
    %1893 = vperm.xlu0 %1892, %v1839
    %v1894 = vpop.permute.xlu0 %1893
    %1897 = vset.pattern.permute.xlu0 0
    %1898 = vperm.xlu0 %1897, %v1840
    %v1899 = vpop.permute.xlu0 %1898
    %1902 = vset.pattern.permute.xlu0 0
    %1903 = vperm.xlu0 %1902, %v1841
    %v1904 = vpop.permute.xlu0 %1903
    %1907 = vset.pattern.permute.xlu0 0
    %1908 = vperm.xlu0 %1907, %v1842
    %v1909 = vpop.permute.xlu0 %1908
    %1912 = vset.pattern.permute.xlu0 0
    %1913 = vperm.xlu0 %1912, %v1843
    %v1914 = vpop.permute.xlu0 %1913
    %1917 = vset.pattern.permute.xlu0 0
    %1918 = vperm.xlu0 %1917, %v1844
    %v1919 = vpop.permute.xlu0 %1918
    %1922 = vset.pattern.permute.xlu0 0
    %1923 = vperm.xlu0 %1922, %v1845
    %v1924 = vpop.permute.xlu0 %1923
    %v1927 = vsel %vm660, %v1814, 0
    %v1930 = vsel %vm660, %v1815, 0
    %v1933 = vsel %vm660, %v1816, 0
    %v1936 = vsel %vm660, %v1817, 0
    %v1939 = vsel %vm660, %v1818, 0
    %v1942 = vsel %vm660, %v1819, 0
    %v1945 = vsel %vm660, %v1820, 0
    %v1948 = vsel %vm660, %v1821, 0
    %v1951 = vsel %vm660, %v1822, 0
    %v1954 = vsel %vm660, %v1823, 0
    %v1957 = vsel %vm660, %v1824, 0
    %v1960 = vsel %vm660, %v1825, 0
    %v1963 = vsel %vm660, %v1826, 0
    %v1966 = vsel %vm660, %v1827, 0
    %v1969 = vsel %vm660, %v1828, 0
    %v1972 = vsel %vm660, %v1829, 0
    %1974 = vmatprep.subr.mxu0 0.0
    %1975 = vmatpush1.msra.mxu0 %v1806
    %1976 = vmatprep.subr.mxu0 0.0
    %1977 = vmatpush1.msra.mxu0 %v1807
    %1978 = vmatprep.subr.mxu0 0.0
    %1979 = vmatpush1.msra.mxu0 %v1808
    %1980 = vmatprep.subr.mxu0 0.0
    %1981 = vmatpush1.msra.mxu0 %v1809
    %1982 = vmatprep.subr.mxu0 0.0
    %1983 = vmatpush1.msra.mxu0 %v1810
    %1984 = vmatprep.subr.mxu0 0.0
    %1985 = vmatpush1.msra.mxu0 %v1811
    %1986 = vmatprep.subr.mxu0 0.0
    %1987 = vmatpush1.msra.mxu0 %v1812
    %1988 = vmatprep.subr.mxu0 0.0
    %1989 = vmatpush1.msra.mxu0 %v1813
    %1990 = vmatprep.subr.mxu0 0.0
    %1991 = vmatpush1.msra.mxu0 0.0
    %1992 = vmatprep.subr.mxu0 0.0
    %1993 = vmatpush1.msra.mxu0 0.0
    %1994 = vmatprep.subr.mxu0 0.0
    %1995 = vmatpush1.msra.mxu0 0.0
    %1996 = vmatprep.subr.mxu0 0.0
    %1997 = vmatpush1.msra.mxu0 0.0
    %1998 = vmatprep.subr.mxu0 0.0
    %1999 = vmatpush1.msra.mxu0 0.0
    %2000 = vmatprep.subr.mxu0 0.0
    %2001 = vmatpush1.msra.mxu0 0.0
    %2002 = vmatprep.subr.mxu0 0.0
    %2003 = vmatpush1.msra.mxu0 0.0
    %2004 = vmatprep.subr.mxu0 0.0
    %2005 = vmatpush1.msra.mxu0 0.0
    %2006 = vmatprep.subr.mxu0 0.0
    %2007 = vmatpush1.msra.mxu0 0.0
    %2008 = vmatprep.subr.mxu0 0.0
    %2009 = vmatpush1.msra.mxu0 0.0
    %2010 = vmatprep.subr.mxu0 0.0
    %2011 = vmatpush1.msra.mxu0 0.0
    %2012 = vmatprep.subr.mxu0 0.0
    %2013 = vmatpush1.msra.mxu0 0.0
    %2014 = vmatprep.subr.mxu0 0.0
    %2015 = vmatpush1.msra.mxu0 0.0
    %2016 = vmatprep.subr.mxu0 0.0
    %2017 = vmatpush1.msra.mxu0 0.0
    %2018 = vmatprep.subr.mxu0 0.0
    %2019 = vmatpush1.msra.mxu0 0.0
    %2020 = vmatprep.subr.mxu0 0.0
    %2021 = vmatpush1.msra.mxu0 0.0
    %2022 = vmatprep.subr.mxu0 0.0
    %2023 = vmatpush1.msra.mxu0 0.0
    %2024 = vmatprep.subr.mxu0 0.0
    %2025 = vmatpush1.msra.mxu0 0.0
    %2026 = vmatprep.subr.mxu0 0.0
    %2027 = vmatpush1.msra.mxu0 0.0
    %2028 = vmatprep.subr.mxu0 0.0
    %2029 = vmatpush1.msra.mxu0 0.0
    %2030 = vmatprep.subr.mxu0 0.0
    %2031 = vmatpush1.msra.mxu0 0.0
    %2032 = vmatprep.subr.mxu0 0.0
    %2033 = vmatpush1.msra.mxu0 0.0
    %2034 = vmatprep.subr.mxu0 0.0
    %2035 = vmatpush1.msra.mxu0 0.0
    %2036 = vmatprep.subr.mxu0 0.0
    %2037 = vmatpush1.msra.mxu0 0.0
    %2038 = vmatprep.mubr.f32.mxu0 0.0
    %2039 = vmatmul.mubr.f32.gmra.mrb[0].mxu0 %v1927
    %v2040 = vpop.f32.mrb[0].mxu0
    %v2041 = vadd.f32 %v1849, %v2040
    %v2042 = vpop.f32.mrb[0].mxu0
    %2043 = vmatprep.mubr.f32.mxu0 0.0
    %2044 = vmatmul.mubr.f32.gmra.mrb[0].mxu0 %v1930
    %v2045 = vpop.f32.mrb[0].mxu0
    %v2046 = vadd.f32 %v1854, %v2045
    %v2047 = vpop.f32.mrb[0].mxu0
    %2048 = vmatprep.mubr.f32.mxu0 0.0
    %2049 = vmatmul.mubr.f32.gmra.mrb[0].mxu0 %v1933
    %v2050 = vpop.f32.mrb[0].mxu0
    %v2051 = vadd.f32 %v1859, %v2050
    %v2052 = vpop.f32.mrb[0].mxu0
    %2053 = vmatprep.mubr.f32.mxu0 0.0
    %2054 = vmatmul.mubr.f32.gmra.mrb[0].mxu0 %v1936
    %v2055 = vpop.f32.mrb[0].mxu0
    %v2056 = vadd.f32 %v1864, %v2055
    %v2057 = vpop.f32.mrb[0].mxu0
    %2058 = vmatprep.mubr.f32.mxu0 0.0
    %2059 = vmatmul.mubr.f32.gmra.mrb[0].mxu0 %v1939
    %v2060 = vpop.f32.mrb[0].mxu0
    %v2061 = vadd.f32 %v1869, %v2060
    %v2062 = vpop.f32.mrb[0].mxu0
    %2063 = vmatprep.mubr.f32.mxu0 0.0
    %2064 = vmatmul.mubr.f32.gmra.mrb[0].mxu0 %v1942
    %v2065 = vpop.f32.mrb[0].mxu0
    %v2066 = vadd.f32 %v1874, %v2065
    %v2067 = vpop.f32.mrb[0].mxu0
    %2068 = vmatprep.mubr.f32.mxu0 0.0
    %2069 = vmatmul.mubr.f32.gmra.mrb[0].mxu0 %v1945
    %v2070 = vpop.f32.mrb[0].mxu0
    %v2071 = vadd.f32 %v1879, %v2070
    %v2072 = vpop.f32.mrb[0].mxu0
    %2073 = vmatprep.mubr.f32.mxu0 0.0
    %2074 = vmatmul.mubr.f32.gmra.mrb[0].mxu0 %v1948
    %v2075 = vpop.f32.mrb[0].mxu0
    %v2076 = vadd.f32 %v1884, %v2075
    %v2077 = vpop.f32.mrb[0].mxu0
    %2078 = vmatprep.mubr.f32.mxu0 0.0
    %2079 = vmatmul.mubr.f32.gmra.mrb[0].mxu0 %v1951
    %v2080 = vpop.f32.mrb[0].mxu0
    %v2081 = vadd.f32 %v1889, %v2080
    %v2082 = vpop.f32.mrb[0].mxu0
    %2083 = vmatprep.mubr.f32.mxu0 0.0
    %2084 = vmatmul.mubr.f32.gmra.mrb[0].mxu0 %v1954
    %v2085 = vpop.f32.mrb[0].mxu0
    %v2086 = vadd.f32 %v1894, %v2085
    %v2087 = vpop.f32.mrb[0].mxu0
    %2088 = vmatprep.mubr.f32.mxu0 0.0
    %2089 = vmatmul.mubr.f32.gmra.mrb[0].mxu0 %v1957
    %v2090 = vpop.f32.mrb[0].mxu0
    %v2091 = vadd.f32 %v1899, %v2090
    %v2092 = vpop.f32.mrb[0].mxu0
    %2093 = vmatprep.mubr.f32.mxu0 0.0
    %2094 = vmatmul.mubr.f32.gmra.mrb[0].mxu0 %v1960
    %v2095 = vpop.f32.mrb[0].mxu0
    %v2096 = vadd.f32 %v1904, %v2095
    %v2097 = vpop.f32.mrb[0].mxu0
    %2098 = vmatprep.mubr.f32.mxu0 0.0
    %2099 = vmatmul.mubr.f32.gmra.mrb[0].mxu0 %v1963
    %v2100 = vpop.f32.mrb[0].mxu0
    %v2101 = vadd.f32 %v1909, %v2100
    %v2102 = vpop.f32.mrb[0].mxu0
    %2103 = vmatprep.mubr.f32.mxu0 0.0
    %2104 = vmatmul.mubr.f32.gmra.mrb[0].mxu0 %v1966
    %v2105 = vpop.f32.mrb[0].mxu0
    %v2106 = vadd.f32 %v1914, %v2105
    %v2107 = vpop.f32.mrb[0].mxu0
    %2108 = vmatprep.mubr.f32.mxu0 0.0
    %2109 = vmatmul.mubr.f32.gmra.mrb[0].mxu0 %v1969
    %v2110 = vpop.f32.mrb[0].mxu0
    %v2111 = vadd.f32 %v1919, %v2110
    %v2112 = vpop.f32.mrb[0].mxu0
    %2113 = vmatprep.mubr.f32.mxu0 0.0
    %2114 = vmatmul.mubr.f32.gmra.mrb[0].mxu0 %v1972
    %v2115 = vpop.f32.mrb[0].mxu0
    %v2116 = vadd.f32 %v1924, %v2115
    %v2117 = vpop.f32.mrb[0].mxu0
    %2118 = vdwg.mxu0
    %v2119 = vmax.f32 %v2041, 0.0
    %v2120 = vmax.f32 %v2046, 0.0
    %v2121 = vmax.f32 %v2051, 0.0
    %v2122 = vmax.f32 %v2056, 0.0
    %v2123 = vmax.f32 %v2061, 0.0
    %v2124 = vmax.f32 %v2066, 0.0
    %v2125 = vmax.f32 %v2071, 0.0
    %v2126 = vmax.f32 %v2076, 0.0
    %v2127 = vmax.f32 %v2081, 0.0
    %v2128 = vmax.f32 %v2086, 0.0
    %v2129 = vmax.f32 %v2091, 0.0
    %v2130 = vmax.f32 %v2096, 0.0
    %v2131 = vmax.f32 %v2101, 0.0
    %v2132 = vmax.f32 %v2106, 0.0
    %v2133 = vmax.f32 %v2111, 0.0
    %v2134 = vmax.f32 %v2116, 0.0
    %v2135 = vld [vmem:[%s11] sm:$0xff]
    %v2136 = vld [vmem:[%s11 + $0x8] sm:$0xff]
    %v2137 = vld [vmem:[%s11 + $0x10] sm:$0xff]
    %v2138 = vld [vmem:[%s11 + $0x18] sm:$0xff]
    %v2139 = vld [vmem:[%s11 + $0x20] sm:$0xff]
    %v2140 = vld [vmem:[%s11 + $0x28] sm:$0xff]
    %v2141 = vld [vmem:[%s11 + $0x30] sm:$0xff]
    %v2142 = vld [vmem:[%s11 + $0x38] sm:$0xff]
    %v2143 = vld [vmem:[%s12] sm:$0xff]
    %v2144 = vld [vmem:[%s12 + $0x8] sm:$0xff]
    %v2145 = vld [vmem:[%s12 + $0x10] sm:$0xff]
    %v2146 = vld [vmem:[%s12 + $0x18] sm:$0xff]
    %v2147 = vld [vmem:[%s12 + $0x20] sm:$0xff]
    %v2148 = vld [vmem:[%s12 + $0x28] sm:$0xff]
    %v2149 = vld [vmem:[%s12 + $0x30] sm:$0xff]
    %v2150 = vld [vmem:[%s12 + $0x38] sm:$0xff]
    %2152 = vset.pattern.permute.xlu0 0
    %2153 = vperm.xlu0 %2152, %v2143
    %v2154 = vpop.permute.xlu0 %2153
    %2157 = vset.pattern.permute.xlu0 0
    %2158 = vperm.xlu0 %2157, %v2144
    %v2159 = vpop.permute.xlu0 %2158
    %2162 = vset.pattern.permute.xlu0 0
    %2163 = vperm.xlu0 %2162, %v2145
    %v2164 = vpop.permute.xlu0 %2163
    %2167 = vset.pattern.permute.xlu0 0
    %2168 = vperm.xlu0 %2167, %v2146
    %v2169 = vpop.permute.xlu0 %2168
    %2172 = vset.pattern.permute.xlu0 0
    %2173 = vperm.xlu0 %2172, %v2147
    %v2174 = vpop.permute.xlu0 %2173
    %2177 = vset.pattern.permute.xlu0 0
    %2178 = vperm.xlu0 %2177, %v2148
    %v2179 = vpop.permute.xlu0 %2178
    %2182 = vset.pattern.permute.xlu0 0
    %2183 = vperm.xlu0 %2182, %v2149
    %v2184 = vpop.permute.xlu0 %2183
    %2187 = vset.pattern.permute.xlu0 0
    %2188 = vperm.xlu0 %2187, %v2150
    %v2189 = vpop.permute.xlu0 %2188
    %2191 = vmatprep.subr.mxu0 0.0
    %2192 = vmatpush1.msra.mxu0 %v2119
    %2193 = vmatprep.subr.mxu0 0.0
    %2194 = vmatpush1.msra.mxu0 %v2120
    %2195 = vmatprep.subr.mxu0 0.0
    %2196 = vmatpush1.msra.mxu0 %v2121
    %2197 = vmatprep.subr.mxu0 0.0
    %2198 = vmatpush1.msra.mxu0 %v2122
    %2199 = vmatprep.subr.mxu0 0.0
    %2200 = vmatpush1.msra.mxu0 %v2123
    %2201 = vmatprep.subr.mxu0 0.0
    %2202 = vmatpush1.msra.mxu0 %v2124
    %2203 = vmatprep.subr.mxu0 0.0
    %2204 = vmatpush1.msra.mxu0 %v2125
    %2205 = vmatprep.subr.mxu0 0.0
    %2206 = vmatpush1.msra.mxu0 %v2126
    %2207 = vmatprep.subr.mxu0 0.0
    %2208 = vmatpush1.msra.mxu0 %v2127
    %2209 = vmatprep.subr.mxu0 0.0
    %2210 = vmatpush1.msra.mxu0 %v2128
    %2211 = vmatprep.subr.mxu0 0.0
    %2212 = vmatpush1.msra.mxu0 %v2129
    %2213 = vmatprep.subr.mxu0 0.0
    %2214 = vmatpush1.msra.mxu0 %v2130
    %2215 = vmatprep.subr.mxu0 0.0
    %2216 = vmatpush1.msra.mxu0 %v2131
    %2217 = vmatprep.subr.mxu0 0.0
    %2218 = vmatpush1.msra.mxu0 %v2132
    %2219 = vmatprep.subr.mxu0 0.0
    %2220 = vmatpush1.msra.mxu0 %v2133
    %2221 = vmatprep.subr.mxu0 0.0
    %2222 = vmatpush1.msra.mxu0 %v2134
    %2223 = vmatprep.subr.mxu0 0.0
    %2224 = vmatpush1.msra.mxu0 0.0
    %2225 = vmatprep.subr.mxu0 0.0
    %2226 = vmatpush1.msra.mxu0 0.0
    %2227 = vmatprep.subr.mxu0 0.0
    %2228 = vmatpush1.msra.mxu0 0.0
    %2229 = vmatprep.subr.mxu0 0.0
    %2230 = vmatpush1.msra.mxu0 0.0
    %2231 = vmatprep.subr.mxu0 0.0
    %2232 = vmatpush1.msra.mxu0 0.0
    %2233 = vmatprep.subr.mxu0 0.0
    %2234 = vmatpush1.msra.mxu0 0.0
    %2235 = vmatprep.subr.mxu0 0.0
    %2236 = vmatpush1.msra.mxu0 0.0
    %2237 = vmatprep.subr.mxu0 0.0
    %2238 = vmatpush1.msra.mxu0 0.0
    %2239 = vmatprep.subr.mxu0 0.0
    %2240 = vmatpush1.msra.mxu0 0.0
    %2241 = vmatprep.subr.mxu0 0.0
    %2242 = vmatpush1.msra.mxu0 0.0
    %2243 = vmatprep.subr.mxu0 0.0
    %2244 = vmatpush1.msra.mxu0 0.0
    %2245 = vmatprep.subr.mxu0 0.0
    %2246 = vmatpush1.msra.mxu0 0.0
    %2247 = vmatprep.subr.mxu0 0.0
    %2248 = vmatpush1.msra.mxu0 0.0
    %2249 = vmatprep.subr.mxu0 0.0
    %2250 = vmatpush1.msra.mxu0 0.0
    %2251 = vmatprep.subr.mxu0 0.0
    %2252 = vmatpush1.msra.mxu0 0.0
    %2253 = vmatprep.subr.mxu0 0.0
    %2254 = vmatpush1.msra.mxu0 0.0
    %2255 = vmatprep.mubr.f32.mxu0 0.0
    %2256 = vmatmul.mubr.f32.gmra.mrb[0].mxu0 %v2135
    %v2257 = vpop.f32.mrb[0].mxu0
    %v2258 = vadd.f32 %v2154, %v2257
    %v2259 = vpop.f32.mrb[0].mxu0
    %2260 = vmatprep.mubr.f32.mxu0 0.0
    %2261 = vmatmul.mubr.f32.gmra.mrb[0].mxu0 %v2136
    %v2262 = vpop.f32.mrb[0].mxu0
    %v2263 = vadd.f32 %v2159, %v2262
    %v2264 = vpop.f32.mrb[0].mxu0
    %2265 = vmatprep.mubr.f32.mxu0 0.0
    %2266 = vmatmul.mubr.f32.gmra.mrb[0].mxu0 %v2137
    %v2267 = vpop.f32.mrb[0].mxu0
    %v2268 = vadd.f32 %v2164, %v2267
    %v2269 = vpop.f32.mrb[0].mxu0
    %2270 = vmatprep.mubr.f32.mxu0 0.0
    %2271 = vmatmul.mubr.f32.gmra.mrb[0].mxu0 %v2138
    %v2272 = vpop.f32.mrb[0].mxu0
    %v2273 = vadd.f32 %v2169, %v2272
    %v2274 = vpop.f32.mrb[0].mxu0
    %2275 = vmatprep.mubr.f32.mxu0 0.0
    %2276 = vmatmul.mubr.f32.gmra.mrb[0].mxu0 %v2139
    %v2277 = vpop.f32.mrb[0].mxu0
    %v2278 = vadd.f32 %v2174, %v2277
    %v2279 = vpop.f32.mrb[0].mxu0
    %2280 = vmatprep.mubr.f32.mxu0 0.0
    %2281 = vmatmul.mubr.f32.gmra.mrb[0].mxu0 %v2140
    %v2282 = vpop.f32.mrb[0].mxu0
    %v2283 = vadd.f32 %v2179, %v2282
    %v2284 = vpop.f32.mrb[0].mxu0
    %2285 = vmatprep.mubr.f32.mxu0 0.0
    %2286 = vmatmul.mubr.f32.gmra.mrb[0].mxu0 %v2141
    %v2287 = vpop.f32.mrb[0].mxu0
    %v2288 = vadd.f32 %v2184, %v2287
    %v2289 = vpop.f32.mrb[0].mxu0
    %2290 = vmatprep.mubr.f32.mxu0 0.0
    %2291 = vmatmul.mubr.f32.gmra.mrb[0].mxu0 %v2142
    %v2292 = vpop.f32.mrb[0].mxu0
    %v2293 = vadd.f32 %v2189, %v2292
    %v2294 = vpop.f32.mrb[0].mxu0
    %2295 = vdwg.mxu0
    %v2296 = vmax.f32 %v2258, 0.0
    %v2297 = vmax.f32 %v2263, 0.0
    %v2298 = vmax.f32 %v2268, 0.0
    %v2299 = vmax.f32 %v2273, 0.0
    %v2300 = vmax.f32 %v2278, 0.0
    %v2301 = vmax.f32 %v2283, 0.0
    %v2302 = vmax.f32 %v2288, 0.0
    %v2303 = vmax.f32 %v2293, 0.0
    %v2304 = vld [vmem:[%s13] sm:$0xf]
    %v2305 = vld [vmem:[%s14] sm:$0xf]
    %2307 = vset.pattern.permute.xlu0 0
    %2308 = vperm.xlu0 %2307, %v2305
    %v2309 = vpop.permute.xlu0 %2308
    %v2312 = vsel %vm660, %v2304, 0
    %2314 = vmatprep.subr.mxu0 0.0
    %2315 = vmatpush1.msra.mxu0 %v2296
    %2316 = vmatprep.subr.mxu0 0.0
    %2317 = vmatpush1.msra.mxu0 %v2297
    %2318 = vmatprep.subr.mxu0 0.0
    %2319 = vmatpush1.msra.mxu0 %v2298
    %2320 = vmatprep.subr.mxu0 0.0
    %2321 = vmatpush1.msra.mxu0 %v2299
    %2322 = vmatprep.subr.mxu0 0.0
    %2323 = vmatpush1.msra.mxu0 %v2300
    %2324 = vmatprep.subr.mxu0 0.0
    %2325 = vmatpush1.msra.mxu0 %v2301
    %2326 = vmatprep.subr.mxu0 0.0
    %2327 = vmatpush1.msra.mxu0 %v2302
    %2328 = vmatprep.subr.mxu0 0.0
    %2329 = vmatpush1.msra.mxu0 %v2303
    %2330 = vmatprep.subr.mxu0 0.0
    %2331 = vmatpush1.msra.mxu0 0.0
    %2332 = vmatprep.subr.mxu0 0.0
    %2333 = vmatpush1.msra.mxu0 0.0
    %2334 = vmatprep.subr.mxu0 0.0
    %2335 = vmatpush1.msra.mxu0 0.0
    %2336 = vmatprep.subr.mxu0 0.0
    %2337 = vmatpush1.msra.mxu0 0.0
    %2338 = vmatprep.subr.mxu0 0.0
    %2339 = vmatpush1.msra.mxu0 0.0
    %2340 = vmatprep.subr.mxu0 0.0
    %2341 = vmatpush1.msra.mxu0 0.0
    %2342 = vmatprep.subr.mxu0 0.0
    %2343 = vmatpush1.msra.mxu0 0.0
    %2344 = vmatprep.subr.mxu0 0.0
    %2345 = vmatpush1.msra.mxu0 0.0
    %2346 = vmatprep.subr.mxu0 0.0
    %2347 = vmatpush1.msra.mxu0 0.0
    %2348 = vmatprep.subr.mxu0 0.0
    %2349 = vmatpush1.msra.mxu0 0.0
    %2350 = vmatprep.subr.mxu0 0.0
    %2351 = vmatpush1.msra.mxu0 0.0
    %2352 = vmatprep.subr.mxu0 0.0
    %2353 = vmatpush1.msra.mxu0 0.0
    %2354 = vmatprep.subr.mxu0 0.0
    %2355 = vmatpush1.msra.mxu0 0.0
    %2356 = vmatprep.subr.mxu0 0.0
    %2357 = vmatpush1.msra.mxu0 0.0
    %2358 = vmatprep.subr.mxu0 0.0
    %2359 = vmatpush1.msra.mxu0 0.0
    %2360 = vmatprep.subr.mxu0 0.0
    %2361 = vmatpush1.msra.mxu0 0.0
    %2362 = vmatprep.subr.mxu0 0.0
    %2363 = vmatpush1.msra.mxu0 0.0
    %2364 = vmatprep.subr.mxu0 0.0
    %2365 = vmatpush1.msra.mxu0 0.0
    %2366 = vmatprep.subr.mxu0 0.0
    %2367 = vmatpush1.msra.mxu0 0.0
    %2368 = vmatprep.subr.mxu0 0.0
    %2369 = vmatpush1.msra.mxu0 0.0
    %2370 = vmatprep.subr.mxu0 0.0
    %2371 = vmatpush1.msra.mxu0 0.0
    %2372 = vmatprep.subr.mxu0 0.0
    %2373 = vmatpush1.msra.mxu0 0.0
    %2374 = vmatprep.subr.mxu0 0.0
    %2375 = vmatpush1.msra.mxu0 0.0
    %2376 = vmatprep.subr.mxu0 0.0
    %2377 = vmatpush1.msra.mxu0 0.0
    %2378 = vmatprep.mubr.f32.mxu0 0.0
    %2379 = vmatmul.mubr.f32.gmra.mrb[0].mxu0 %v2312
    %v2380 = vpop.f32.mrb[0].mxu0
    %v2381 = vadd.f32 %v2309, %v2380
    %v2382 = vpop.f32.mrb[0].mxu0
    %2383 = vdwg.mxu0
    %v2384 = vxor.u32 %v2381, 2147483648
    %v2385 = vmul.f32 %v2384, 1.442695
    %v2386 = vpow.pop %v2385
    %v2387 = vadd.f32 %v2386, 1.0
    %v2388 = vrcp.pop %v2387
    %v2389 = vmul.f32 1.0, %v2388
    %v2390 = vmul.f32 %v2389, 2.0
    %v2391 = vadd.f32 %v2390, 0.2
    %v2392 = vmul.f32 %v2391, %v1420
    %v2394 = vrot.slane %v1420, 1
    %v2396 = vmul.f32 %v2391, %v2394
    %v2398 = vrot.slane %v2396, 1
    %v2400 = vadd.f32 %v2392, %v2398
    %v2401 = vsub.f32 0.0, %v2400
    %v2402 = vrot.slane %v1420, 7
    %v2404 = vmul.f32 %v2391, %v2402
    %v2406 = vrot.slane %v2392, 1
    %v2408 = vadd.f32 %v2404, %v2406
    %v2409 = vsub.f32 0.0, %v2408
    %v2411 = vrot.slane %v2409, 1
    %vm2413 = vcmask 1040384
    %v2414 = vsel %vm2413, %v2401, %v2411
    %2415 = vst [vmem:[#allocation2] sm:$0x3] %v2414
    // Predicated region
    $region62: #{tpu_custom_call.1} parent=1 // pred_check
      _
    $region63: #{tpu_custom_call.1} parent=1 // pred_check_branch
      %2417 = sbr.rel (0) target = $region65
    $region64: #{tpu_custom_call.1} parent=1 // pred_region
      %s2419 = ssub.s32 32, 32
      %2420 = vsyncadd [#allocation3], %s2419
      %s2422 = sshll.u32 [#allocation2], 4
      %s2423 = int_to_ptr.vmem [resolvable:$true] %s2422
      %2425 = dma.vmem_to_hbm [thread:$0]  %s2423, 32, %s15, [#allocation3]
    $region65: #{tpu_custom_call.1} parent=1 // pred_fallthru
      _
    // Predicated region
    $region66: #{tpu_custom_call.1} parent=1 // pred_check
      _
    $region67: #{tpu_custom_call.1} parent=1 // pred_check_branch
      %2427 = sbr.rel (0) target = $region69
    $region68: #{tpu_custom_call.1} parent=1 // pred_region
      %2428 = dma.done [#allocation3], 32
    $region69: #{tpu_custom_call.1} parent=1 // pred_fallthru
      _
    %2429 = vsyncpa [#allocation3], 1

</llo_original>
